<compile_context>
chip_gen: v6e
topology: v6e:2x2x1
jax: 0.10.0
libtpu: 0.0.40
codegen_flags: <defaults>
</compile_context>

<pallas_src>
import jax
import jax.numpy as jnp
from jax import lax
from jax.experimental import pallas as pl
from jax.experimental.pallas import tpu as pltpu


_LANE = 128


# ------------------------------ small helpers ------------------------------ #

def _round_up(a, b):
    return ((a + b - 1) // b) * b


def _pick_cp_tn(cout):
    """Output-channel padding + lane tile.  tn is maximized (tn = Cp when
    Cp <= 512) so the activation block is fetched once per image."""
    if cout <= 512:
        return cout, cout                      # no channel padding, one j tile
    cp = _round_up(cout, _LANE)
    for tn in (512, 256, 128):
        if cp % tn == 0:
            return cp, tn
    return cp, _LANE


def _fold_bn(gamma, beta, mean, var, eps=1e-5):
    scale = (gamma / jnp.sqrt(var + eps)).astype(jnp.float32)
    shift = (beta - mean * scale).astype(jnp.float32)
    return scale, shift


def _pad_last(x, c):
    if x.shape[-1] == c:
        return x
    pads = [(0, 0)] * (x.ndim - 1) + [(0, c - x.shape[-1])]
    return jnp.pad(x, pads)


def _conv3x3_weights(w_oihw, scale, cout_pad, cin_pad=None):
    """(Cout,Cin,3,3) -> (9, Cin_pad, Cout_pad) bf16 with BN scale folded.
    Tap t = kh*3 + kw."""
    cout, cin, _, _ = w_oihw.shape
    w = jnp.transpose(w_oihw, (2, 3, 1, 0)).reshape(9, cin, cout)
    w = w * scale[None, None, :]
    cin_pad = cin if cin_pad is None else cin_pad
    w = jnp.pad(w, ((0, 0), (0, cin_pad - cin), (0, cout_pad - cout)))
    return w.astype(jnp.bfloat16)


def _phase_split(x_nhwc, stride):
    """Zero-pad spatially by 1 and split into stride x stride phases.

    Returns (N*stride*stride, Hph, Wph, C): phase (a, b) at flat index
    a*stride + b holds padded pixels (a::stride, b::stride).  For stride=1
    this is just the padded activation; either way it is ~1x extra traffic
    instead of the 9x im2col blow-up."""
    N, H, W, C = x_nhwc.shape
    s = stride
    xp = jnp.pad(x_nhwc, ((0, 0), (1, 1), (1, 1), (0, 0)))
    if s == 1:
        return xp, H + 2, W + 2
    Hp = _round_up(H + 2, s)
    Wp = _round_up(W + 2, s)
    xp = jnp.pad(xp, ((0, 0), (0, Hp - (H + 2)), (0, Wp - (W + 2)), (0, 0)))
    xp = xp.reshape(N, Hp // s, s, Wp // s, s, C)
    xp = jnp.transpose(xp, (0, 2, 4, 1, 3, 5))          # (N, s, s, Hph, Wph, C)
    return xp.reshape(N * s * s, Hp // s, Wp // s, C), Hp // s, Wp // s


# ------------------------------ Pallas kernels ------------------------------ #

def _make_conv_kernel(stride, Ho, Wo, shortcut):
    """Fused 3x3 conv (+BN, folded) + optional shortcut + ReLU.

    The 3x3 conv is 9 shifted-window matmuls accumulating in f32; the folded
    BN bias initializes the accumulator (no epilogue bias stream)."""
    s = stride
    M = Ho * Wo
    taps = [(kh, kw) for kh in range(3) for kw in range(3)]

    def body(x_ref, w_ref, b_ref, o_ref, xs_ref=None, ws_ref=None):
        tn = o_ref.shape[-1]
        cin = w_ref.shape[1]
        # Load each phase slab once (whole padded image is VMEM-resident).
        phases = [x_ref[p] for p in range(s * s)]
        acc = b_ref[...].astype(jnp.float32)              # (1, tn) bias-as-init
        for kh, kw in taps:
            ph = phases[(kh % s) * s + (kw % s)]
            dh, dw = kh // s, kw // s
            slab = ph[dh:dh + Ho, dw:dw + Wo, :]           # (Ho, Wo, cin) bf16
            acc = acc + jnp.dot(slab.reshape(M, cin), w_ref[kh * 3 + kw],
                                preferred_element_type=jnp.float32)
        if shortcut == "identity":
            acc = acc + xs_ref[0].reshape(M, tn).astype(jnp.float32)
        elif shortcut == "proj":
            csc = ws_ref.shape[0]
            acc = acc + jnp.dot(xs_ref[0].reshape(M, csc), ws_ref[...],
                                preferred_element_type=jnp.float32)
        o_ref[0] = jnp.maximum(acc, 0.0).reshape(Ho, Wo, tn).astype(o_ref.dtype)

    if shortcut is None:
        def kernel(x_ref, w_ref, b_ref, o_ref):
            body(x_ref, w_ref, b_ref, o_ref)
    elif shortcut == "identity":
        def kernel(x_ref, w_ref, b_ref, xs_ref, o_ref):
            body(x_ref, w_ref, b_ref, o_ref, xs_ref=xs_ref)
    else:
        def kernel(x_ref, w_ref, b_ref, xs_ref, ws_ref, o_ref):
            body(x_ref, w_ref, b_ref, o_ref, xs_ref=xs_ref, ws_ref=ws_ref)
    return kernel


def _fused_conv_bn_act(xph, w9, bias, *, stride, Ho, Wo, out_dtype,
                       shortcut=None, x_sc=None, w_sc=None):
    s = stride
    NP, Hph, Wph, cin = xph.shape
    N = NP // (s * s)
    Cp = w9.shape[-1]
    _, tn = _pick_cp_tn(Cp)
    J = Cp // tn

    kernel = _make_conv_kernel(stride, Ho, Wo, shortcut)

    in_specs = [
        pl.BlockSpec((s * s, Hph, Wph, cin), lambda n, j: (n, 0, 0, 0)),
        pl.BlockSpec((9, cin, tn), lambda n, j: (0, 0, j)),
        pl.BlockSpec((1, tn), lambda n, j: (0, j)),
    ]
    args = [xph, w9, bias.reshape(1, -1).astype(jnp.float32)]
    if shortcut == "identity":
        in_specs.append(pl.BlockSpec((1, Ho, Wo, tn), lambda n, j: (n, 0, 0, j)))
        args.append(x_sc)
    elif shortcut == "proj":
        csc = x_sc.shape[-1]
        in_specs.append(pl.BlockSpec((1, Ho, Wo, csc), lambda n, j: (n, 0, 0, 0)))
        in_specs.append(pl.BlockSpec((csc, tn), lambda n, j: (0, j)))
        args += [x_sc, w_sc]

    # VMEM budget derived from actual block footprint (double-buffered inputs
    # + f32 accumulator temporaries); clamped to stay safe on v7x (64 MiB).
    out_bytes = 2 if out_dtype == jnp.bfloat16 else 4
    block_bytes = (s * s * Hph * Wph * cin * 2        # activation phases (bf16)
                   + 9 * cin * tn * 2                 # folded weights
                   + tn * 4                           # bias
                   + Ho * Wo * tn * out_bytes         # output block
                   + Ho * Wo * tn * 4)                # f32 accumulator
    if shortcut == "identity":
        block_bytes += Ho * Wo * tn * 2
    elif shortcut == "proj":
        block_bytes += Ho * Wo * x_sc.shape[-1] * 2 + x_sc.shape[-1] * tn * 2
    vmem_limit = min(64 << 20, max(32 << 20, 4 * block_bytes + (8 << 20)))

    out = pl.pallas_call(
        kernel,
        out_shape=jax.ShapeDtypeStruct((N, Ho, Wo, Cp), out_dtype),
        grid_spec=pltpu.PrefetchScalarGridSpec(
            num_scalar_prefetch=0,
            grid=(N, J),
            in_specs=in_specs,
            out_specs=pl.BlockSpec((1, Ho, Wo, tn), lambda n, j: (n, 0, 0, j)),
        ),
        compiler_params=pltpu.CompilerParams(
            dimension_semantics=("parallel", "parallel"),
            vmem_limit_bytes=vmem_limit),
    )(*args)
    return out


# ---------------------------- ResBlock forward ------------------------------ #

def res_block_forward(x_nchw, params, stride):
    x = jnp.transpose(x_nchw, (0, 2, 3, 1)).astype(jnp.bfloat16)   # NHWC bf16
    N, H, W, Cin = x.shape
    Cout = params["w1"].shape[0]
    Ho = (H - 1) // stride + 1
    Wo = (W - 1) // stride + 1
    Cp, _ = _pick_cp_tn(Cout)

    # conv1 + bn1 + relu  (BN scale folded into weights, shift folds into acc init)
    s1, b1 = _fold_bn(params["bn1_gamma"], params["bn1_beta"],
                      params["bn1_mean"], params["bn1_var"])
    w1 = _conv3x3_weights(params["w1"], s1, Cp)
    xph1, _, _ = _phase_split(x, stride)
    h1 = _fused_conv_bn_act(xph1, w1, _pad_last(b1, Cp), stride=stride,
                            Ho=Ho, Wo=Wo, out_dtype=jnp.bfloat16)
    # h1: (N, Ho, Wo, Cp) bf16

    # conv2 + bn2 + shortcut + relu (single fused kernel)
    s2, b2 = _fold_bn(params["bn2_gamma"], params["bn2_beta"],
                      params["bn2_mean"], params["bn2_var"])
    w2 = _conv3x3_weights(params["w2"], s2, Cp, cin_pad=Cp)
    xph2, _, _ = _phase_split(h1, 1)

    if "wsc" in params:
        # 1x1 conv stride=s projection shortcut, BN folded, biases combined.
        ssc, bsc = _fold_bn(params["bnsc_gamma"], params["bnsc_beta"],
                            params["bnsc_mean"], params["bnsc_var"])
        Csc = _round_up(Cin, _LANE)
        w_sc = jnp.transpose(params["wsc"].reshape(Cout, Cin), (1, 0)) * ssc[None, :]
        w_sc = jnp.pad(w_sc, ((0, Csc - Cin), (0, Cp - Cout))).astype(jnp.bfloat16)
        x_sc = _pad_last(x[:, ::stride, ::stride, :][:, :Ho, :Wo, :], Csc)
        out = _fused_conv_bn_act(xph2, w2, _pad_last(b2 + bsc, Cp), stride=1,
                                 Ho=Ho, Wo=Wo, out_dtype=jnp.float32,
                                 shortcut="proj", x_sc=x_sc, w_sc=w_sc)
    else:
        assert stride == 1 and Cin == Cout, "identity shortcut needs stride=1, Cin==Cout"
        x_sc = _pad_last(x, Cp)                          # bf16 residual, no upcast
        out = _fused_conv_bn_act(xph2, w2, _pad_last(b2, Cp), stride=1,
                                 Ho=Ho, Wo=Wo, out_dtype=jnp.float32,
                                 shortcut="identity", x_sc=x_sc)

    out = out[..., :Cout]
    return jnp.transpose(out, (0, 3, 1, 2)).astype(jnp.float32)     # -> NCHW


# ------------------------------ pure-JAX reference -------------------------- #

def _ref_forward(x_nchw, params, stride, eps=1e-5):
    def conv(x, w, s, pad):
        return lax.conv_general_dilated(
            x, w, (s, s), [(pad, pad), (pad, pad)],
            dimension_numbers=("NCHW", "OIHW", "NCHW"))

    def bn(x, g, b, m, v):
        g, b, m, v = (a[None, :, None, None] for a in (g, b, m, v))
        return (x - m) / jnp.sqrt(v + eps) * g + b

    out = jax.nn.relu(bn(conv(x_nchw, params["w1"], stride, 1),
                         params["bn1_gamma"], params["bn1_beta"],
                         params["bn1_mean"], params["bn1_var"]))
    out = bn(conv(out, params["w2"], 1, 1),
             params["bn2_gamma"], params["bn2_beta"],
             params["bn2_mean"], params["bn2_var"])
    if "wsc" in params:
        sc = bn(conv(x_nchw, params["wsc"], stride, 0),
                params["bnsc_gamma"], params["bnsc_beta"],
                params["bnsc_mean"], params["bnsc_var"])
    else:
        sc = x_nchw
    return jax.nn.relu(out + sc)


# ---------------------------------- main ------------------------------------ #

def _make_params(key, cin, cout, stride):
    ks = jax.random.split(key, 12)
    params = {
        "w1": 0.1 * jax.random.normal(ks[0], (cout, cin, 3, 3), jnp.float32),
        "bn1_gamma": 0.5 + jax.random.uniform(ks[1], (cout,), jnp.float32),
        "bn1_beta": 0.1 * jax.random.normal(ks[2], (cout,), jnp.float32),
        "bn1_mean": 0.1 * jax.random.normal(ks[3], (cout,), jnp.float32),
        "bn1_var": 0.5 + jax.random.uniform(ks[4], (cout,), jnp.float32),
        "w2": 0.1 * jax.random.normal(ks[5], (cout, cout, 3, 3), jnp.float32),
        "bn2_gamma": 0.5 + jax.random.uniform(ks[6], (cout,), jnp.float32),
        "bn2_beta": 0.1 * jax.random.normal(ks[7], (cout,), jnp.float32),
        "bn2_mean": 0.1 * jax.random.normal(ks[8], (cout,), jnp.float32),
        "bn2_var": 0.5 + jax.random.uniform(ks[9], (cout,), jnp.float32),
    }
    if stride != 1 or cin != cout:
        ks2 = jax.random.split(ks[10], 5)
        params.update({
            "wsc": 0.1 * jax.random.normal(ks2[0], (cout, cin, 1, 1), jnp.float32),
            "bnsc_gamma": 0.5 + jax.random.uniform(ks2[1], (cout,), jnp.float32),
            "bnsc_beta": 0.1 * jax.random.normal(ks2[2], (cout,), jnp.float32),
            "bnsc_mean": 0.1 * jax.random.normal(ks2[3], (cout,), jnp.float32),
            "bnsc_var": 0.5 + jax.random.uniform(ks2[4], (cout,), jnp.float32),
        })
    return params


if __name__ == "__main__":
    key = jax.random.PRNGKey(0)
    k_x, k_p, k_x2, k_p2 = jax.random.split(key, 4)

    # Config 1: downsampling block (stride-2 conv, fused 1x1-projection shortcut).
    N, Cin, H, W = 2, 4, 16, 16
    Cout, stride = 8, 2
    x = jax.random.normal(k_x, (N, Cin, H, W), jnp.float32)
    params = _make_params(k_p, Cin, Cout, stride)
    out = jax.block_until_ready(res_block_forward(x, params, stride))
    ref = _ref_forward(x, params, stride)
    assert out.shape == ref.shape, (out.shape, ref.shape)
    assert jnp.allclose(out, ref, rtol=5e-2, atol=5e-2), \
        float(jnp.max(jnp.abs(out - ref)))

    # Config 2: identity-shortcut block (bf16 residual add inside the kernel).
    N2, C2, H2, W2, stride2 = 2, 8, 8, 8, 1
    x2 = jax.random.normal(k_x2, (N2, C2, H2, W2), jnp.float32)
    params2 = _make_params(k_p2, C2, C2, stride2)
    out2 = jax.block_until_ready(res_block_forward(x2, params2, stride2))
    ref2 = _ref_forward(x2, params2, stride2)
    assert out2.shape == ref2.shape, (out2.shape, ref2.shape)
    assert jnp.allclose(out2, ref2, rtol=5e-2, atol=5e-2), \
        float(jnp.max(jnp.abs(out2 - ref2)))

    print("KERNEL_OK")
</pallas_src>

<mosaic_0001>
module attributes {stable_mosaic.version = 11 : i64} {
  func.func @kernel(%arg0: i32, %arg1: i32, %arg2: memref<4x9x9x4xbf16, #tpu.memory_space<vmem>>, %arg3: memref<9x4x8xbf16, #tpu.memory_space<vmem>>, %arg4: memref<1x8xf32, #tpu.memory_space<vmem>>, %arg5: memref<1x8x8x8xbf16, #tpu.memory_space<vmem>>) attributes {dimension_semantics = [#tpu.dimension_semantics<parallel>, #tpu.dimension_semantics<parallel>], iteration_bounds = array<i64: 2, 1>, scalar_prefetch = 0 : i64, scratch_operands = 0 : i64, tpu.core_type = #tpu.core_type<tc>, window_params = [{transform_indices = @transform_0, window_bounds = array<i64: 4, 9, 9, 4>}, {transform_indices = @transform_1, window_bounds = array<i64: 9, 4, 8>}, {transform_indices = @transform_2, window_bounds = array<i64: 1, 8>}, {transform_indices = @transform_3, window_bounds = array<i64: 1, 8, 8, 8>}]} {
    %c0 = arith.constant 0 : index
    %c0_0 = arith.constant 0 : index
    %c0_1 = arith.constant 0 : index
    %c0_2 = arith.constant 0 : index
    %0 = vector.load %arg2[%c0, %c0_0, %c0_1, %c0_2] : memref<4x9x9x4xbf16, #tpu.memory_space<vmem>>, vector<1x9x9x4xbf16>
    %1 = vector.shape_cast %0 : vector<1x9x9x4xbf16> to vector<9x9x4xbf16>
    %c1 = arith.constant 1 : index
    %c0_3 = arith.constant 0 : index
    %c0_4 = arith.constant 0 : index
    %c0_5 = arith.constant 0 : index
    %2 = vector.load %arg2[%c1, %c0_3, %c0_4, %c0_5] : memref<4x9x9x4xbf16, #tpu.memory_space<vmem>>, vector<1x9x9x4xbf16>
    %3 = vector.shape_cast %2 : vector<1x9x9x4xbf16> to vector<9x9x4xbf16>
    %c2 = arith.constant 2 : index
    %c0_6 = arith.constant 0 : index
    %c0_7 = arith.constant 0 : index
    %c0_8 = arith.constant 0 : index
    %4 = vector.load %arg2[%c2, %c0_6, %c0_7, %c0_8] : memref<4x9x9x4xbf16, #tpu.memory_space<vmem>>, vector<1x9x9x4xbf16>
    %5 = vector.shape_cast %4 : vector<1x9x9x4xbf16> to vector<9x9x4xbf16>
    %c3 = arith.constant 3 : index
    %c0_9 = arith.constant 0 : index
    %c0_10 = arith.constant 0 : index
    %c0_11 = arith.constant 0 : index
    %6 = vector.load %arg2[%c3, %c0_9, %c0_10, %c0_11] : memref<4x9x9x4xbf16, #tpu.memory_space<vmem>>, vector<1x9x9x4xbf16>
    %7 = vector.shape_cast %6 : vector<1x9x9x4xbf16> to vector<9x9x4xbf16>
    %c0_12 = arith.constant 0 : index
    %c0_13 = arith.constant 0 : index
    %8 = vector.load %arg4[%c0_12, %c0_13] : memref<1x8xf32, #tpu.memory_space<vmem>>, vector<1x8xf32>
    %9 = vector.extract_strided_slice %1 {offsets = [0, 0, 0], sizes = [8, 8, 4], strides = [1, 1, 1]} : vector<9x9x4xbf16> to vector<8x8x4xbf16>
    %10 = vector.shape_cast %9 : vector<8x8x4xbf16> to vector<64x4xbf16>
    %c0_14 = arith.constant 0 : index
    %c0_15 = arith.constant 0 : index
    %c0_16 = arith.constant 0 : index
    %11 = vector.load %arg3[%c0_14, %c0_15, %c0_16] : memref<9x4x8xbf16, #tpu.memory_space<vmem>>, vector<1x4x8xbf16>
    %12 = vector.shape_cast %11 : vector<1x4x8xbf16> to vector<4x8xbf16>
    %cst = arith.constant dense<0.000000e+00> : vector<64x8xf32>
    %13 = tpu.matmul %10, %12, %cst {dimension_numbers = #tpu.dot_dimension_numbers<[1], [0], [0], [1], [0, 0, 1, 1], [], []>} : vector<64x4xbf16>, vector<4x8xbf16>, vector<64x8xf32> -> vector<64x8xf32>
    %14 = vector.broadcast %8 : vector<1x8xf32> to vector<64x8xf32>
    %15 = arith.addf %14, %13 : vector<64x8xf32>
    %16 = vector.extract_strided_slice %3 {offsets = [0, 0, 0], sizes = [8, 8, 4], strides = [1, 1, 1]} : vector<9x9x4xbf16> to vector<8x8x4xbf16>
    %17 = vector.shape_cast %16 : vector<8x8x4xbf16> to vector<64x4xbf16>
    %c1_17 = arith.constant 1 : index
    %c0_18 = arith.constant 0 : index
    %c0_19 = arith.constant 0 : index
    %18 = vector.load %arg3[%c1_17, %c0_18, %c0_19] : memref<9x4x8xbf16, #tpu.memory_space<vmem>>, vector<1x4x8xbf16>
    %19 = vector.shape_cast %18 : vector<1x4x8xbf16> to vector<4x8xbf16>
    %cst_20 = arith.constant dense<0.000000e+00> : vector<64x8xf32>
    %20 = tpu.matmul %17, %19, %cst_20 {dimension_numbers = #tpu.dot_dimension_numbers<[1], [0], [0], [1], [0, 0, 1, 1], [], []>} : vector<64x4xbf16>, vector<4x8xbf16>, vector<64x8xf32> -> vector<64x8xf32>
    %21 = arith.addf %15, %20 : vector<64x8xf32>
    %22 = vector.extract_strided_slice %1 {offsets = [0, 1, 0], sizes = [8, 8, 4], strides = [1, 1, 1]} : vector<9x9x4xbf16> to vector<8x8x4xbf16>
    %23 = vector.shape_cast %22 : vector<8x8x4xbf16> to vector<64x4xbf16>
    %c2_21 = arith.constant 2 : index
    %c0_22 = arith.constant 0 : index
    %c0_23 = arith.constant 0 : index
    %24 = vector.load %arg3[%c2_21, %c0_22, %c0_23] : memref<9x4x8xbf16, #tpu.memory_space<vmem>>, vector<1x4x8xbf16>
    %25 = vector.shape_cast %24 : vector<1x4x8xbf16> to vector<4x8xbf16>
    %cst_24 = arith.constant dense<0.000000e+00> : vector<64x8xf32>
    %26 = tpu.matmul %23, %25, %cst_24 {dimension_numbers = #tpu.dot_dimension_numbers<[1], [0], [0], [1], [0, 0, 1, 1], [], []>} : vector<64x4xbf16>, vector<4x8xbf16>, vector<64x8xf32> -> vector<64x8xf32>
    %27 = arith.addf %21, %26 : vector<64x8xf32>
    %28 = vector.extract_strided_slice %5 {offsets = [0, 0, 0], sizes = [8, 8, 4], strides = [1, 1, 1]} : vector<9x9x4xbf16> to vector<8x8x4xbf16>
    %29 = vector.shape_cast %28 : vector<8x8x4xbf16> to vector<64x4xbf16>
    %c3_25 = arith.constant 3 : index
    %c0_26 = arith.constant 0 : index
    %c0_27 = arith.constant 0 : index
    %30 = vector.load %arg3[%c3_25, %c0_26, %c0_27] : memref<9x4x8xbf16, #tpu.memory_space<vmem>>, vector<1x4x8xbf16>
    %31 = vector.shape_cast %30 : vector<1x4x8xbf16> to vector<4x8xbf16>
    %cst_28 = arith.constant dense<0.000000e+00> : vector<64x8xf32>
    %32 = tpu.matmul %29, %31, %cst_28 {dimension_numbers = #tpu.dot_dimension_numbers<[1], [0], [0], [1], [0, 0, 1, 1], [], []>} : vector<64x4xbf16>, vector<4x8xbf16>, vector<64x8xf32> -> vector<64x8xf32>
    %33 = arith.addf %27, %32 : vector<64x8xf32>
    %34 = vector.extract_strided_slice %7 {offsets = [0, 0, 0], sizes = [8, 8, 4], strides = [1, 1, 1]} : vector<9x9x4xbf16> to vector<8x8x4xbf16>
    %35 = vector.shape_cast %34 : vector<8x8x4xbf16> to vector<64x4xbf16>
    %c4 = arith.constant 4 : index
    %c0_29 = arith.constant 0 : index
    %c0_30 = arith.constant 0 : index
    %36 = vector.load %arg3[%c4, %c0_29, %c0_30] : memref<9x4x8xbf16, #tpu.memory_space<vmem>>, vector<1x4x8xbf16>
    %37 = vector.shape_cast %36 : vector<1x4x8xbf16> to vector<4x8xbf16>
    %cst_31 = arith.constant dense<0.000000e+00> : vector<64x8xf32>
    %38 = tpu.matmul %35, %37, %cst_31 {dimension_numbers = #tpu.dot_dimension_numbers<[1], [0], [0], [1], [0, 0, 1, 1], [], []>} : vector<64x4xbf16>, vector<4x8xbf16>, vector<64x8xf32> -> vector<64x8xf32>
    %39 = arith.addf %33, %38 : vector<64x8xf32>
    %40 = vector.extract_strided_slice %5 {offsets = [0, 1, 0], sizes = [8, 8, 4], strides = [1, 1, 1]} : vector<9x9x4xbf16> to vector<8x8x4xbf16>
    %41 = vector.shape_cast %40 : vector<8x8x4xbf16> to vector<64x4xbf16>
    %c5 = arith.constant 5 : index
    %c0_32 = arith.constant 0 : index
    %c0_33 = arith.constant 0 : index
    %42 = vector.load %arg3[%c5, %c0_32, %c0_33] : memref<9x4x8xbf16, #tpu.memory_space<vmem>>, vector<1x4x8xbf16>
    %43 = vector.shape_cast %42 : vector<1x4x8xbf16> to vector<4x8xbf16>
    %cst_34 = arith.constant dense<0.000000e+00> : vector<64x8xf32>
    %44 = tpu.matmul %41, %43, %cst_34 {dimension_numbers = #tpu.dot_dimension_numbers<[1], [0], [0], [1], [0, 0, 1, 1], [], []>} : vector<64x4xbf16>, vector<4x8xbf16>, vector<64x8xf32> -> vector<64x8xf32>
    %45 = arith.addf %39, %44 : vector<64x8xf32>
    %46 = vector.extract_strided_slice %1 {offsets = [1, 0, 0], sizes = [8, 8, 4], strides = [1, 1, 1]} : vector<9x9x4xbf16> to vector<8x8x4xbf16>
    %47 = vector.shape_cast %46 : vector<8x8x4xbf16> to vector<64x4xbf16>
    %c6 = arith.constant 6 : index
    %c0_35 = arith.constant 0 : index
    %c0_36 = arith.constant 0 : index
    %48 = vector.load %arg3[%c6, %c0_35, %c0_36] : memref<9x4x8xbf16, #tpu.memory_space<vmem>>, vector<1x4x8xbf16>
    %49 = vector.shape_cast %48 : vector<1x4x8xbf16> to vector<4x8xbf16>
    %cst_37 = arith.constant dense<0.000000e+00> : vector<64x8xf32>
    %50 = tpu.matmul %47, %49, %cst_37 {dimension_numbers = #tpu.dot_dimension_numbers<[1], [0], [0], [1], [0, 0, 1, 1], [], []>} : vector<64x4xbf16>, vector<4x8xbf16>, vector<64x8xf32> -> vector<64x8xf32>
    %51 = arith.addf %45, %50 : vector<64x8xf32>
    %52 = vector.extract_strided_slice %3 {offsets = [1, 0, 0], sizes = [8, 8, 4], strides = [1, 1, 1]} : vector<9x9x4xbf16> to vector<8x8x4xbf16>
    %53 = vector.shape_cast %52 : vector<8x8x4xbf16> to vector<64x4xbf16>
    %c7 = arith.constant 7 : index
    %c0_38 = arith.constant 0 : index
    %c0_39 = arith.constant 0 : index
    %54 = vector.load %arg3[%c7, %c0_38, %c0_39] : memref<9x4x8xbf16, #tpu.memory_space<vmem>>, vector<1x4x8xbf16>
    %55 = vector.shape_cast %54 : vector<1x4x8xbf16> to vector<4x8xbf16>
    %cst_40 = arith.constant dense<0.000000e+00> : vector<64x8xf32>
    %56 = tpu.matmul %53, %55, %cst_40 {dimension_numbers = #tpu.dot_dimension_numbers<[1], [0], [0], [1], [0, 0, 1, 1], [], []>} : vector<64x4xbf16>, vector<4x8xbf16>, vector<64x8xf32> -> vector<64x8xf32>
    %57 = arith.addf %51, %56 : vector<64x8xf32>
    %58 = vector.extract_strided_slice %1 {offsets = [1, 1, 0], sizes = [8, 8, 4], strides = [1, 1, 1]} : vector<9x9x4xbf16> to vector<8x8x4xbf16>
    %59 = vector.shape_cast %58 : vector<8x8x4xbf16> to vector<64x4xbf16>
    %c8 = arith.constant 8 : index
    %c0_41 = arith.constant 0 : index
    %c0_42 = arith.constant 0 : index
    %60 = vector.load %arg3[%c8, %c0_41, %c0_42] : memref<9x4x8xbf16, #tpu.memory_space<vmem>>, vector<1x4x8xbf16>
    %61 = vector.shape_cast %60 : vector<1x4x8xbf16> to vector<4x8xbf16>
    %cst_43 = arith.constant dense<0.000000e+00> : vector<64x8xf32>
    %62 = tpu.matmul %59, %61, %cst_43 {dimension_numbers = #tpu.dot_dimension_numbers<[1], [0], [0], [1], [0, 0, 1, 1], [], []>} : vector<64x4xbf16>, vector<4x8xbf16>, vector<64x8xf32> -> vector<64x8xf32>
    %63 = arith.addf %57, %62 : vector<64x8xf32>
    %cst_44 = arith.constant 0.000000e+00 : f32
    %64 = vector.broadcast %cst_44 : f32 to vector<64x8xf32>
    %65 = arith.maximumf %63, %64 : vector<64x8xf32>
    %66 = vector.shape_cast %65 : vector<64x8xf32> to vector<8x8x8xf32>
    %67 = arith.truncf %66 : vector<8x8x8xf32> to vector<8x8x8xbf16>
    %c0_45 = arith.constant 0 : index
    %c0_46 = arith.constant 0 : index
    %c0_47 = arith.constant 0 : index
    %c0_48 = arith.constant 0 : index
    %68 = vector.load %arg5[%c0_45, %c0_46, %c0_47, %c0_48] : memref<1x8x8x8xbf16, #tpu.memory_space<vmem>>, vector<1x8x8x8xbf16>
    %69 = vector.shape_cast %68 : vector<1x8x8x8xbf16> to vector<8x8x8xbf16>
    %70 = vector.shape_cast %67 : vector<8x8x8xbf16> to vector<1x8x8x8xbf16>
    tpu.vector_store %arg5[%c0_45, %c0_46, %c0_47, %c0_48], %70 {strides = array<i32>} : memref<1x8x8x8xbf16, #tpu.memory_space<vmem>>, vector<1x8x8x8xbf16>,
    return
  }
  func.func @transform_0(%arg0: i32, %arg1: i32) -> (i32, i32, i32, i32) {
    %c0_i32 = arith.constant 0 : i32
    %c0_i32_0 = arith.constant 0 : i32
    %c0_i32_1 = arith.constant 0 : i32
    %c0_i32_2 = arith.constant 0 : i32
    return %arg0, %c0_i32, %c0_i32_0, %c0_i32_1 : i32, i32, i32, i32
  }
  func.func @transform_1(%arg0: i32, %arg1: i32) -> (i32, i32, i32) {
    %c0_i32 = arith.constant 0 : i32
    %c0_i32_0 = arith.constant 0 : i32
    %c0_i32_1 = arith.constant 0 : i32
    return %c0_i32, %c0_i32_0, %arg1 : i32, i32, i32
  }
  func.func @transform_2(%arg0: i32, %arg1: i32) -> (i32, i32) {
    %c0_i32 = arith.constant 0 : i32
    %c0_i32_0 = arith.constant 0 : i32
    return %c0_i32, %arg1 : i32, i32
  }
  func.func @transform_3(%arg0: i32, %arg1: i32) -> (i32, i32, i32, i32) {
    %c0_i32 = arith.constant 0 : i32
    %c0_i32_0 = arith.constant 0 : i32
    %c0_i32_1 = arith.constant 0 : i32
    return %arg0, %c0_i32, %c0_i32_0, %arg1 : i32, i32, i32, i32
  }
}

</mosaic_0001>

<llo_original>
// kernel: tpu_custom_call.1
$region0: #{tpu_custom_call.1}
  #allocation0 [shape = 'u32[]', space=smem, size = 0x4, offset = 0x4, fixed_abs, tag = 'smem constant byte address 0x4 - core index']
  #allocation1 [shape = 'u32[144,128]{1,0:T(1,128)}', space=vmem, size = 0x12000, scoped, tag = 'internal scratch']
  %s0 = inlined_call_operand.vmem [shape: bf16[8,9,9,4], index: 0, kind: input, shape index: {}]
  %s1 = inlined_call_operand.vmem [shape: bf16[9,4,8], index: 1, kind: input, shape index: {}]
  %s2 = inlined_call_operand.vmem [shape: f32[1,8], index: 2, kind: input, shape index: {}]
  %s3 = inlined_call_operand.hbm [shape: bf16[2,8,8,8], index: 3, kind: output, shape index: {}]
  %s4 = sld [smem:[#allocation0]]
  $region45: #{tpu_custom_call.1} parent=0
    _
  %s6 = ssub.s32 1, %s4
  %s7 = scalar_select 0, %s6, %s4
  $region1: #{tpu_custom_call.1} parent=0
    #allocation2 [shape = 'u8[32768]{0}', space=vmem, size = 0x8000, scoped, tag = 'output window, operand 0']
    #allocation3 [shape = 's32[2]{0}', space=sflag, size = 0x8, scoped, tag = 'scoped memory for tpu_custom_call.1']
    %8 = vsyncpa [#allocation3], 0
    %s9 = scalar_lea.sflag [#allocation3], 1
    %10 = vsyncpa %s9, 0
    loop: start=0, step=1, limit=4
    $region2: #{tpu_custom_call.1} parent=1 // loop_pre_header
      _
    $region3: #{tpu_custom_call.1} parent=1 // loop_header
      %s12 = sphi 0, %s16
      %p13 = scmp.ge.s32.totalorder %s12, 4
      %s19 = sphi 0, %s31
      %s20 = sphi 0, %s27
      %s21 = sphi 0, %s19
      %s22 = sphi 0, %s20
      %s23 = sphi 0, %s21
      %s24 = sphi 0, %s22
      %s34 = sphi 0, %s36
      %s37 = sphi 0, %s34
      %s38 = sphi 0, %s37
      %s54 = sphi 0, %s38
      %s60 = sphi 0, %s62
      %s63 = sphi 0, %s60
      %s64 = sphi 0, %s63
      %s80 = sphi 0, %s64
      %s86 = sphi 0, %s88
      %s89 = sphi 0, %s86
      %s90 = sphi 0, %s89
      %s106 = sphi 0, %s90
      %s114 = sphi 0, %s116
      %s117 = sphi 0, %s114
      %s118 = sphi 0, %s117
      %s134 = sphi 0, %s118
    $region4: #{tpu_custom_call.1} parent=1 // loop_header_branch
      %15 = sbr.rel (%p13) target = $region8
    $region5: #{tpu_custom_call.1} parent=1 // loop_body
      %s17 = ssub.s32 %s12, 1
      %s18 = ssub.s32 %s12, 2
      %s25 = sadd.s32 1, %s20
      %p26 = scmp.ge.s32.totalorder %s25, 1
      %s27 = scalar_select %p26, 0, %s25
      %s28 = sadd.s32 1, %s19
      %s29 = scalar_select %p26, %s28, %s19
      %p30 = scmp.ge.s32.totalorder %s29, 2
      %s31 = scalar_select %p30, 0, %s29
      %s32 = ssub.s32 %s19, %s31
      %p33 = scmp.eq.s32.totalorder %s32, 0
      %s35 = sadd.s32 %s34, 1
      %s36 = scalar_select %p33, %s34, %s35
      %p39 = pneg %p33
      %p40 = scmp.eq.s32.totalorder %s12, 1
      %p41 = por %p39, %p40
      %p42 = scmp.ne.s32.totalorder %s34, %s37
      %p43 = scmp.eq.s32.totalorder %s12, 0
      %p44 = por %p42, %p43
      %p45 = scmp.ne.s32.totalorder %s34, %s37
      %p46 = scmp.eq.s32.totalorder %s17, 1
      %p47 = por %p45, %p46
      %p48 = scmp.ne.s32.totalorder %s37, %s38
      %p49 = scmp.eq.s32.totalorder %s17, 0
      %p50 = por %p48, %p49
      %p51 = scmp.ne.s32.totalorder %s37, %s38
      %p52 = scmp.eq.s32.totalorder %s18, 1
      %p53 = por %p51, %p52
      %p55 = scmp.ne.s32.totalorder %s38, %s54
      %p56 = scmp.eq.s32.totalorder %s18, 0
      %p57 = por %p55, %p56
      %s58 = ssub.s32 %s20, %s27
      %p59 = scmp.eq.s32.totalorder %s58, 0
      %s61 = sadd.s32 %s60, 1
      %s62 = scalar_select %p59, %s60, %s61
      %p65 = pneg %p59
      %p66 = scmp.eq.s32.totalorder %s12, 1
      %p67 = por %p65, %p66
      %p68 = scmp.ne.s32.totalorder %s60, %s63
      %p69 = scmp.eq.s32.totalorder %s12, 0
      %p70 = por %p68, %p69
      %p71 = scmp.ne.s32.totalorder %s60, %s63
      %p72 = scmp.eq.s32.totalorder %s17, 1
      %p73 = por %p71, %p72
      %p74 = scmp.ne.s32.totalorder %s63, %s64
      %p75 = scmp.eq.s32.totalorder %s17, 0
      %p76 = por %p74, %p75
      %p77 = scmp.ne.s32.totalorder %s63, %s64
      %p78 = scmp.eq.s32.totalorder %s18, 1
      %p79 = por %p77, %p78
      %p81 = scmp.ne.s32.totalorder %s64, %s80
      %p82 = scmp.eq.s32.totalorder %s18, 0
      %p83 = por %p81, %p82
      %s84 = ssub.s32 %s20, %s27
      %p85 = scmp.eq.s32.totalorder %s84, 0
      %s87 = sadd.s32 %s86, 1
      %s88 = scalar_select %p85, %s86, %s87
      %p91 = pneg %p85
      %p92 = scmp.eq.s32.totalorder %s12, 1
      %p93 = por %p91, %p92
      %p94 = scmp.ne.s32.totalorder %s86, %s89
      %p95 = scmp.eq.s32.totalorder %s12, 0
      %p96 = por %p94, %p95
      %p97 = scmp.ne.s32.totalorder %s86, %s89
      %p98 = scmp.eq.s32.totalorder %s17, 1
      %p99 = por %p97, %p98
      %p100 = scmp.ne.s32.totalorder %s89, %s90
      %p101 = scmp.eq.s32.totalorder %s17, 0
      %p102 = por %p100, %p101
      %p103 = scmp.ne.s32.totalorder %s89, %s90
      %p104 = scmp.eq.s32.totalorder %s18, 1
      %p105 = por %p103, %p104
      %p107 = scmp.ne.s32.totalorder %s90, %s106
      %p108 = scmp.eq.s32.totalorder %s18, 0
      %p109 = por %p107, %p108
      %s110 = ssub.s32 %s19, %s31
      %s111 = ssub.s32 %s20, %s27
      %s112 = sor.u32 %s110, %s111
      %p113 = scmp.eq.s32.totalorder %s112, 0
      %s115 = sadd.s32 %s114, 1
      %s116 = scalar_select %p113, %s114, %s115
      %p119 = pneg %p113
      %p120 = scmp.eq.s32.totalorder %s12, 1
      %p121 = por %p119, %p120
      %p122 = scmp.ne.s32.totalorder %s114, %s117
      %p123 = scmp.eq.s32.totalorder %s12, 0
      %p124 = por %p122, %p123
      %p125 = scmp.ne.s32.totalorder %s114, %s117
      %p126 = scmp.eq.s32.totalorder %s17, 1
      %p127 = por %p125, %p126
      %p128 = scmp.ne.s32.totalorder %s117, %s118
      %p129 = scmp.eq.s32.totalorder %s17, 0
      %p130 = por %p128, %p129
      %p131 = scmp.ne.s32.totalorder %s117, %s118
      %p132 = scmp.eq.s32.totalorder %s18, 1
      %p133 = por %p131, %p132
      %p135 = scmp.ne.s32.totalorder %s118, %s134
      %p136 = scmp.eq.s32.totalorder %s18, 0
      %p137 = por %p135, %p136
      %p138 = scmp.le.s32.totalorder 1, %s12
      %p139 = scmp.lt.s32.totalorder %s12, 3
      %p140 = pnand %p138, %p139
      %p141 = pneg %p140
      // Predicated region
      $region9: #{tpu_custom_call.1} parent=5 // pred_check
        _
      $region10: #{tpu_custom_call.1} parent=5 // pred_check_branch
        %143 = sbr.rel (%p140) target = $region12
      $region11: #{tpu_custom_call.1} parent=5 // pred_region
        %s144 = ssub.s32 %s12, 1
        // Predicated region
        $region13: #{tpu_custom_call.1} parent=11 // pred_check
          %p145 = pneg %p76
        $region14: #{tpu_custom_call.1} parent=11 // pred_check_branch
          %147 = sbr.rel (%p145) target = $region16
        $region15: #{tpu_custom_call.1} parent=11 // pred_region
          %p148 = scmp.lt.s32.totalorder %s22, 0
          %s149 = scalar_select %p148, %s22, 0
          %s150 = smul.addr %s149, 2
          %s151 = scalar_lea.vmem %s1, %s150
        $region16: #{tpu_custom_call.1} parent=11 // pred_fallthru
          _
        // Predicated region
        $region17: #{tpu_custom_call.1} parent=11 // pred_check
          %p152 = pneg %p102
        $region18: #{tpu_custom_call.1} parent=11 // pred_check_branch
          %154 = sbr.rel (%p152) target = $region20
        $region19: #{tpu_custom_call.1} parent=11 // pred_region
          %p155 = scmp.lt.s32.totalorder %s22, 0
          %s156 = scalar_select %p155, %s22, 0
          %s157 = scalar_lea.vmem %s2, %s156
        $region20: #{tpu_custom_call.1} parent=11 // pred_fallthru
          _
      $region12: #{tpu_custom_call.1} parent=5 // pred_fallthru
        _
      %p158 = scmp.lt.s32.totalorder %s12, 2
      // Predicated region
      $region21: #{tpu_custom_call.1} parent=5 // pred_check
        %p159 = pneg %p158
      $region22: #{tpu_custom_call.1} parent=5 // pred_check_branch
        %161 = sbr.rel (%p159) target = $region24
      $region23: #{tpu_custom_call.1} parent=5 // pred_region
        // Predicated region
        $region25: #{tpu_custom_call.1} parent=23 // pred_check
          %p162 = pneg %p44
        $region26: #{tpu_custom_call.1} parent=23 // pred_check_branch
          %164 = sbr.rel (%p162) target = $region28
        $region27: #{tpu_custom_call.1} parent=23 // pred_region
          %s165 = smul.u32 4, %s19
          %p166 = scmp.lt.s32.totalorder %s165, 7
          %s167 = scalar_select %p166, %s165, 7
          %s168 = smul.addr %s167, 18
          %s169 = smul.addr %s168, 4
          %s170 = scalar_lea.vmem %s0, %s169
          %s171 = smul.u32 4, %s19
        $region28: #{tpu_custom_call.1} parent=23 // pred_fallthru
          _
      $region24: #{tpu_custom_call.1} parent=5 // pred_fallthru
        _
      %p172 = scmp.le.s32.totalorder 1, %s12
      %p173 = scmp.lt.s32.totalorder %s12, 3
      %p174 = pnand %p172, %p173
      %p175 = pneg %p174
      // Predicated region
      $region29: #{tpu_custom_call.1} parent=5 // pred_check
        _
      $region30: #{tpu_custom_call.1} parent=5 // pred_check_branch
        %177 = sbr.rel (%p174) target = $region32
      $region31: #{tpu_custom_call.1} parent=5 // pred_region
        %s178 = ssub.s32 %s12, 1
        %s179 = smul.u32 4, %s21
        %p180 = scmp.lt.s32.totalorder %s179, 7
        %s181 = scalar_select %p180, %s179, 7
        %s182 = smul.addr %s181, 18
        %s183 = smul.addr %s182, 4
        %s184 = scalar_lea.vmem %s0, %s183
        %p185 = pneg %p50
        %p186 = pneg %p47
        %p187 = scmp.lt.s32.totalorder %s22, 0
        %s188 = scalar_select %p187, %s22, 0
        %s189 = smul.addr %s188, 2
        %s190 = scalar_lea.vmem %s1, %s189
        %p191 = pneg %p76
        %p192 = pneg %p73
        %p193 = scmp.lt.s32.totalorder %s22, 0
        %s194 = scalar_select %p193, %s22, 0
        %s195 = scalar_lea.vmem %s2, %s194
        %p196 = pneg %p102
        %p197 = pneg %p99
        %p198 = pneg %p130
        %p199 = pneg %p127
        %s200 = sand.u32 %s117, 1
        %s201 = scalar_lea.sflag [#allocation3], %s200
        %s202 = sand.u32 %s117, 1
        %s203 = smul.addr %s202, 32
        %s204 = scalar_lea.vmem [#allocation2], %s203
        %s205 = smul.u32 4, %s21
        %p206 = scmp.lt.s32.totalorder %s205, 7
        %s207 = scalar_select %p206, %s205, 7
        %s208 = smul.addr %s207, 18
        %s209 = smul.addr %s208, 4
        %s210 = scalar_lea.vmem %s0, %s209
        %s211 = smul.u32 4, %s21
        %p212 = scmp.lt.s32.totalorder %s22, 0
        %s213 = scalar_select %p212, %s22, 0
        %s214 = smul.addr %s213, 2
        %s215 = scalar_lea.vmem %s1, %s214
        %p216 = scmp.lt.s32.totalorder %s22, 0
        %s217 = scalar_select %p216, %s22, 0
        %s218 = scalar_lea.vmem %s2, %s217
        %v220 = vld [vmem:[%s210] sm:$0xf]
        %v221 = vld [vmem:[%s210 + $0x4] sm:$0x1]
        %v222 = vld [vmem:[%s210 + $0x8] sm:$0xf]
        %v223 = vld [vmem:[%s210 + $0xc] sm:$0x1]
        %v224 = vld [vmem:[%s210 + $0x10] sm:$0xf]
        %v225 = vld [vmem:[%s210 + $0x14] sm:$0x1]
        %v226 = vld [vmem:[%s210 + $0x18] sm:$0xf]
        %v227 = vld [vmem:[%s210 + $0x1c] sm:$0x1]
        %v228 = vld [vmem:[%s210 + $0x20] sm:$0xf]
        %v229 = vld [vmem:[%s210 + $0x24] sm:$0x1]
        %v230 = vld [vmem:[%s210 + $0x28] sm:$0xf]
        %v231 = vld [vmem:[%s210 + $0x2c] sm:$0x1]
        %v232 = vld [vmem:[%s210 + $0x30] sm:$0xf]
        %v233 = vld [vmem:[%s210 + $0x34] sm:$0x1]
        %v234 = vld [vmem:[%s210 + $0x38] sm:$0xf]
        %v235 = vld [vmem:[%s210 + $0x3c] sm:$0x1]
        %v236 = vld [vmem:[%s210 + $0x40] sm:$0xf]
        %v237 = vld [vmem:[%s210 + $0x44] sm:$0x1]
        %s238 = scalar_lea.vmem %s210, 72
        %v239 = vld [vmem:[%s238] sm:$0xf]
        %v240 = vld [vmem:[%s238 + $0x8] sm:$0xf]
        %v241 = vld [vmem:[%s238 + $0x10] sm:$0xf]
        %v242 = vld [vmem:[%s238 + $0x18] sm:$0xf]
        %v243 = vld [vmem:[%s238 + $0x20] sm:$0xf]
        %v244 = vld [vmem:[%s238 + $0x28] sm:$0xf]
        %v245 = vld [vmem:[%s238 + $0x30] sm:$0xf]
        %v246 = vld [vmem:[%s238 + $0x38] sm:$0xf]
        %v247 = vld [vmem:[%s238 + $0x40] sm:$0xf]
        %s248 = scalar_lea.vmem %s210, 144
        %v249 = vld [vmem:[%s248] sm:$0xf]
        %v250 = vld [vmem:[%s248 + $0x4] sm:$0x1]
        %v251 = vld [vmem:[%s248 + $0x8] sm:$0xf]
        %v252 = vld [vmem:[%s248 + $0xc] sm:$0x1]
        %v253 = vld [vmem:[%s248 + $0x10] sm:$0xf]
        %v254 = vld [vmem:[%s248 + $0x14] sm:$0x1]
        %v255 = vld [vmem:[%s248 + $0x18] sm:$0xf]
        %v256 = vld [vmem:[%s248 + $0x1c] sm:$0x1]
        %v257 = vld [vmem:[%s248 + $0x20] sm:$0xf]
        %v258 = vld [vmem:[%s248 + $0x24] sm:$0x1]
        %v259 = vld [vmem:[%s248 + $0x28] sm:$0xf]
        %v260 = vld [vmem:[%s248 + $0x2c] sm:$0x1]
        %v261 = vld [vmem:[%s248 + $0x30] sm:$0xf]
        %v262 = vld [vmem:[%s248 + $0x34] sm:$0x1]
        %v263 = vld [vmem:[%s248 + $0x38] sm:$0xf]
        %v264 = vld [vmem:[%s248 + $0x3c] sm:$0x1]
        %s265 = scalar_lea.vmem %s210, 216
        %v266 = vld [vmem:[%s265] sm:$0xf]
        %v267 = vld [vmem:[%s265 + $0x8] sm:$0xf]
        %v268 = vld [vmem:[%s265 + $0x10] sm:$0xf]
        %v269 = vld [vmem:[%s265 + $0x18] sm:$0xf]
        %v270 = vld [vmem:[%s265 + $0x20] sm:$0xf]
        %v271 = vld [vmem:[%s265 + $0x28] sm:$0xf]
        %v272 = vld [vmem:[%s265 + $0x30] sm:$0xf]
        %v273 = vld [vmem:[%s265 + $0x38] sm:$0xf]
        %v274 = vld [vmem:[%s218] sm:$0x1]
        %v275 = vld [vmem:[%s215] sm:$0x3]
        %v284 = vunpack.c.l.b16 %v220
        %v285 = vunpack.c.l.b16 %v222
        %v286 = vunpack.c.l.b16 %v224
        %v287 = vunpack.c.l.b16 %v226
        %v288 = vunpack.c.l.b16 %v228
        %v289 = vunpack.c.l.b16 %v230
        %v290 = vunpack.c.l.b16 %v232
        %v291 = vunpack.c.l.b16 %v234
        %v292 = vpack.c.b16 %v285, %v284
        %v293 = vpack.c.b16 %v287, %v286
        %v294 = vpack.c.b16 %v289, %v288
        %v295 = vpack.c.b16 %v291, %v290
        %vm296 = vcmask 31744
        %v298 = vsel %vm296, %v292, 0
        %v301 = vsel %vm296, %v293, 0
        %v304 = vsel %vm296, %v294, 0
        %v307 = vsel %vm296, %v295, 0
        %vm309 = vcmask 1041408
        %v311 = vsel %vm309, %v275, 0
        %313 = vmatprep.subr.bf16.mxu0 0
        %314 = vmatpush1.bf16.msra.mxu0 0
        %315 = vmatprep.subr.bf16.mxu0 0
        %316 = vmatpush1.bf16.msra.mxu0 0
        %317 = vmatprep.subr.bf16.mxu0 0
        %318 = vmatpush1.bf16.msra.mxu0 0
        %319 = vmatprep.subr.bf16.mxu0 0
        %320 = vmatpush1.bf16.msra.mxu0 0
        %321 = vmatprep.subr.bf16.mxu0 0
        %322 = vmatpush1.bf16.msra.mxu0 0
        %323 = vmatprep.subr.bf16.mxu0 0
        %324 = vmatpush1.bf16.msra.mxu0 0
        %325 = vmatprep.subr.bf16.mxu0 0
        %326 = vmatpush1.bf16.msra.mxu0 0
        %327 = vmatprep.subr.bf16.mxu0 0
        %328 = vmatpush1.bf16.msra.mxu0 %v311
        %329 = vmatprep.subr.bf16.mxu0 0
        %330 = vmatpush2.bf16.msra.mxu0 0
        %331 = vmatprep.subr.bf16.mxu0 0
        %332 = vmatpush2.bf16.msra.mxu0 0
        %333 = vmatprep.subr.bf16.mxu0 0
        %334 = vmatpush2.bf16.msra.mxu0 0
        %335 = vmatprep.subr.bf16.mxu0 0
        %336 = vmatpush2.bf16.msra.mxu0 0
        %337 = vmatprep.subr.bf16.mxu0 0
        %338 = vmatpush2.bf16.msra.mxu0 0
        %339 = vmatprep.subr.bf16.mxu0 0
        %340 = vmatpush2.bf16.msra.mxu0 0
        %341 = vmatprep.subr.bf16.mxu0 0
        %342 = vmatpush2.bf16.msra.mxu0 0
        %343 = vmatprep.subr.bf16.mxu0 0
        %344 = vmatpush2.bf16.msra.mxu0 0
        %345 = vmatprep.mubr.bf16.mxu0 0
        %346 = vmatmul.mubr.bf16.gmra.mxu0 %v298
        %v347 = vpop.f32.mrf.mxu0
        %v348 = vadd.f32 0.0, %v347
        %v349 = vpop.f32.mrf.mxu0
        %v350 = vpop.f32.mrf.mxu0
        %v351 = vadd.f32 0.0, %v350
        %v352 = vpop.f32.mrf.mxu0
        %353 = vmatprep.mubr.bf16.mxu0 0
        %354 = vmatmul.mubr.bf16.gmra.mxu0 %v301
        %v355 = vpop.f32.mrf.mxu0
        %v356 = vadd.f32 0.0, %v355
        %v357 = vpop.f32.mrf.mxu0
        %v358 = vpop.f32.mrf.mxu0
        %v359 = vadd.f32 0.0, %v358
        %v360 = vpop.f32.mrf.mxu0
        %361 = vmatprep.mubr.bf16.mxu0 0
        %362 = vmatmul.mubr.bf16.gmra.mxu0 %v304
        %v363 = vpop.f32.mrf.mxu0
        %v364 = vadd.f32 0.0, %v363
        %v365 = vpop.f32.mrf.mxu0
        %v366 = vpop.f32.mrf.mxu0
        %v367 = vadd.f32 0.0, %v366
        %v368 = vpop.f32.mrf.mxu0
        %369 = vmatprep.mubr.bf16.mxu0 0
        %370 = vmatmul.mubr.bf16.gmra.mxu0 %v307
        %v371 = vpop.f32.mrf.mxu0
        %v372 = vadd.f32 0.0, %v371
        %v373 = vpop.f32.mrf.mxu0
        %v374 = vpop.f32.mrf.mxu0
        %v375 = vadd.f32 0.0, %v374
        %v376 = vpop.f32.mrf.mxu0
        %377 = vdwg.mxu0
        %v379 = vlaneseq
        %v380 = vshrl.u32 %v379, 7
        %v381 = vsub.s32 0, %v380
        %v382 = vrot.slane %v274, %v381
        %v384 = vadd.f32 %v382, %v348
        %v385 = vadd.f32 %v382, %v351
        %v386 = vadd.f32 %v382, %v356
        %v387 = vadd.f32 %v382, %v359
        %v388 = vadd.f32 %v382, %v364
        %v389 = vadd.f32 %v382, %v367
        %v390 = vadd.f32 %v382, %v372
        %v391 = vadd.f32 %v382, %v375
        %s392 = scalar_lea.vmem %s215, 2
        %v393 = vld [vmem:[%s392] sm:$0x3]
        %v402 = vunpack.c.l.b16 %v239
        %v403 = vunpack.c.l.b16 %v240
        %v404 = vunpack.c.l.b16 %v241
        %v405 = vunpack.c.l.b16 %v242
        %v406 = vunpack.c.l.b16 %v243
        %v407 = vunpack.c.l.b16 %v244
        %v408 = vunpack.c.l.b16 %v245
        %v409 = vunpack.c.l.b16 %v246
        %v410 = vpack.c.b16 %v403, %v402
        %v411 = vpack.c.b16 %v405, %v404
        %v412 = vpack.c.b16 %v407, %v406
        %v413 = vpack.c.b16 %v409, %v408
        %v415 = vsel %vm296, %v410, 0
        %v418 = vsel %vm296, %v411, 0
        %v421 = vsel %vm296, %v412, 0
        %v424 = vsel %vm296, %v413, 0
        %v427 = vsel %vm309, %v393, 0
        %429 = vmatprep.subr.bf16.mxu0 0
        %430 = vmatpush1.bf16.msra.mxu0 0
        %431 = vmatprep.subr.bf16.mxu0 0
        %432 = vmatpush1.bf16.msra.mxu0 0
        %433 = vmatprep.subr.bf16.mxu0 0
        %434 = vmatpush1.bf16.msra.mxu0 0
        %435 = vmatprep.subr.bf16.mxu0 0
        %436 = vmatpush1.bf16.msra.mxu0 0
        %437 = vmatprep.subr.bf16.mxu0 0
        %438 = vmatpush1.bf16.msra.mxu0 0
        %439 = vmatprep.subr.bf16.mxu0 0
        %440 = vmatpush1.bf16.msra.mxu0 0
        %441 = vmatprep.subr.bf16.mxu0 0
        %442 = vmatpush1.bf16.msra.mxu0 0
        %443 = vmatprep.subr.bf16.mxu0 0
        %444 = vmatpush1.bf16.msra.mxu0 %v427
        %445 = vmatprep.subr.bf16.mxu0 0
        %446 = vmatpush2.bf16.msra.mxu0 0
        %447 = vmatprep.subr.bf16.mxu0 0
        %448 = vmatpush2.bf16.msra.mxu0 0
        %449 = vmatprep.subr.bf16.mxu0 0
        %450 = vmatpush2.bf16.msra.mxu0 0
        %451 = vmatprep.subr.bf16.mxu0 0
        %452 = vmatpush2.bf16.msra.mxu0 0
        %453 = vmatprep.subr.bf16.mxu0 0
        %454 = vmatpush2.bf16.msra.mxu0 0
        %455 = vmatprep.subr.bf16.mxu0 0
        %456 = vmatpush2.bf16.msra.mxu0 0
        %457 = vmatprep.subr.bf16.mxu0 0
        %458 = vmatpush2.bf16.msra.mxu0 0
        %459 = vmatprep.subr.bf16.mxu0 0
        %460 = vmatpush2.bf16.msra.mxu0 0
        %461 = vmatprep.mubr.bf16.mxu0 0
        %462 = vmatmul.mubr.bf16.gmra.mxu0 %v415
        %v463 = vpop.f32.mrf.mxu0
        %v464 = vadd.f32 0.0, %v463
        %v465 = vpop.f32.mrf.mxu0
        %v466 = vpop.f32.mrf.mxu0
        %v467 = vadd.f32 0.0, %v466
        %v468 = vpop.f32.mrf.mxu0
        %469 = vmatprep.mubr.bf16.mxu0 0
        %470 = vmatmul.mubr.bf16.gmra.mxu0 %v418
        %v471 = vpop.f32.mrf.mxu0
        %v472 = vadd.f32 0.0, %v471
        %v473 = vpop.f32.mrf.mxu0
        %v474 = vpop.f32.mrf.mxu0
        %v475 = vadd.f32 0.0, %v474
        %v476 = vpop.f32.mrf.mxu0
        %477 = vmatprep.mubr.bf16.mxu0 0
        %478 = vmatmul.mubr.bf16.gmra.mxu0 %v421
        %v479 = vpop.f32.mrf.mxu0
        %v480 = vadd.f32 0.0, %v479
        %v481 = vpop.f32.mrf.mxu0
        %v482 = vpop.f32.mrf.mxu0
        %v483 = vadd.f32 0.0, %v482
        %v484 = vpop.f32.mrf.mxu0
        %485 = vmatprep.mubr.bf16.mxu0 0
        %486 = vmatmul.mubr.bf16.gmra.mxu0 %v424
        %v487 = vpop.f32.mrf.mxu0
        %v488 = vadd.f32 0.0, %v487
        %v489 = vpop.f32.mrf.mxu0
        %v490 = vpop.f32.mrf.mxu0
        %v491 = vadd.f32 0.0, %v490
        %v492 = vpop.f32.mrf.mxu0
        %493 = vdwg.mxu0
        %v494 = vadd.f32 %v384, %v464
        %v495 = vadd.f32 %v385, %v467
        %v496 = vadd.f32 %v386, %v472
        %v497 = vadd.f32 %v387, %v475
        %v498 = vadd.f32 %v388, %v480
        %v499 = vadd.f32 %v389, %v483
        %v500 = vadd.f32 %v390, %v488
        %v501 = vadd.f32 %v391, %v491
        %vm502 = vsmask.f32 3328
        %vm503 = vsmask.f32 7440
        %vm504 = vmor %vm502, %vm503
        %v506 = vshrl.u32 %v220, 16
        %v508 = vrot.slane %v506, 4
        %v509 = vshll.u32 %v220, 16
        %v511 = vrot.slane %v509, 5
        %v512 = vor.u32 %v508, %v511
        %v513 = vrot.slane %v512, 4
        %v515 = vshll.u32 %v221, 16
        %v517 = vrot.slane %v515, 5
        %v518 = vsel %vm504, %v513, %v517
        %v520 = vshrl.u32 %v222, 16
        %v522 = vrot.slane %v520, 4
        %v523 = vshll.u32 %v222, 16
        %v525 = vrot.slane %v523, 5
        %v526 = vor.u32 %v522, %v525
        %v527 = vrot.slane %v526, 4
        %v529 = vshll.u32 %v223, 16
        %v531 = vrot.slane %v529, 5
        %v532 = vsel %vm504, %v527, %v531
        %v534 = vshrl.u32 %v224, 16
        %v536 = vrot.slane %v534, 4
        %v537 = vshll.u32 %v224, 16
        %v539 = vrot.slane %v537, 5
        %v540 = vor.u32 %v536, %v539
        %v541 = vrot.slane %v540, 4
        %v543 = vshll.u32 %v225, 16
        %v545 = vrot.slane %v543, 5
        %v546 = vsel %vm504, %v541, %v545
        %v548 = vshrl.u32 %v226, 16
        %v550 = vrot.slane %v548, 4
        %v551 = vshll.u32 %v226, 16
        %v553 = vrot.slane %v551, 5
        %v554 = vor.u32 %v550, %v553
        %v555 = vrot.slane %v554, 4
        %v557 = vshll.u32 %v227, 16
        %v559 = vrot.slane %v557, 5
        %v560 = vsel %vm504, %v555, %v559
        %v562 = vshrl.u32 %v228, 16
        %v564 = vrot.slane %v562, 4
        %v565 = vshll.u32 %v228, 16
        %v567 = vrot.slane %v565, 5
        %v568 = vor.u32 %v564, %v567
        %v569 = vrot.slane %v568, 4
        %v571 = vshll.u32 %v229, 16
        %v573 = vrot.slane %v571, 5
        %v574 = vsel %vm504, %v569, %v573
        %v576 = vshrl.u32 %v230, 16
        %v578 = vrot.slane %v576, 4
        %v579 = vshll.u32 %v230, 16
        %v581 = vrot.slane %v579, 5
        %v582 = vor.u32 %v578, %v581
        %v583 = vrot.slane %v582, 4
        %v585 = vshll.u32 %v231, 16
        %v587 = vrot.slane %v585, 5
        %v588 = vsel %vm504, %v583, %v587
        %v590 = vshrl.u32 %v232, 16
        %v592 = vrot.slane %v590, 4
        %v593 = vshll.u32 %v232, 16
        %v595 = vrot.slane %v593, 5
        %v596 = vor.u32 %v592, %v595
        %v597 = vrot.slane %v596, 4
        %v599 = vshll.u32 %v233, 16
        %v601 = vrot.slane %v599, 5
        %v602 = vsel %vm504, %v597, %v601
        %v604 = vshrl.u32 %v234, 16
        %v606 = vrot.slane %v604, 4
        %v607 = vshll.u32 %v234, 16
        %v609 = vrot.slane %v607, 5
        %v610 = vor.u32 %v606, %v609
        %v611 = vrot.slane %v610, 4
        %v613 = vshll.u32 %v235, 16
        %v615 = vrot.slane %v613, 5
        %v616 = vsel %vm504, %v611, %v615
        %s617 = scalar_lea.vmem %s215, 4
        %v618 = vld [vmem:[%s617] sm:$0x3]
        %v619 = vunpack.c.l.b16 %v518
        %v620 = vunpack.c.l.b16 %v532
        %v621 = vunpack.c.l.b16 %v546
        %v622 = vunpack.c.l.b16 %v560
        %v623 = vunpack.c.l.b16 %v574
        %v624 = vunpack.c.l.b16 %v588
        %v625 = vunpack.c.l.b16 %v602
        %v626 = vunpack.c.l.b16 %v616
        %v627 = vpack.c.b16 %v620, %v619
        %v628 = vpack.c.b16 %v622, %v621
        %v629 = vpack.c.b16 %v624, %v623
        %v630 = vpack.c.b16 %v626, %v625
        %v632 = vsel %vm296, %v627, 0
        %v635 = vsel %vm296, %v628, 0
        %v638 = vsel %vm296, %v629, 0
        %v641 = vsel %vm296, %v630, 0
        %v644 = vsel %vm309, %v618, 0
        %646 = vmatprep.subr.bf16.mxu0 0
        %647 = vmatpush1.bf16.msra.mxu0 0
        %648 = vmatprep.subr.bf16.mxu0 0
        %649 = vmatpush1.bf16.msra.mxu0 0
        %650 = vmatprep.subr.bf16.mxu0 0
        %651 = vmatpush1.bf16.msra.mxu0 0
        %652 = vmatprep.subr.bf16.mxu0 0
        %653 = vmatpush1.bf16.msra.mxu0 0
        %654 = vmatprep.subr.bf16.mxu0 0
        %655 = vmatpush1.bf16.msra.mxu0 0
        %656 = vmatprep.subr.bf16.mxu0 0
        %657 = vmatpush1.bf16.msra.mxu0 0
        %658 = vmatprep.subr.bf16.mxu0 0
        %659 = vmatpush1.bf16.msra.mxu0 0
        %660 = vmatprep.subr.bf16.mxu0 0
        %661 = vmatpush1.bf16.msra.mxu0 %v644
        %662 = vmatprep.subr.bf16.mxu0 0
        %663 = vmatpush2.bf16.msra.mxu0 0
        %664 = vmatprep.subr.bf16.mxu0 0
        %665 = vmatpush2.bf16.msra.mxu0 0
        %666 = vmatprep.subr.bf16.mxu0 0
        %667 = vmatpush2.bf16.msra.mxu0 0
        %668 = vmatprep.subr.bf16.mxu0 0
        %669 = vmatpush2.bf16.msra.mxu0 0
        %670 = vmatprep.subr.bf16.mxu0 0
        %671 = vmatpush2.bf16.msra.mxu0 0
        %672 = vmatprep.subr.bf16.mxu0 0
        %673 = vmatpush2.bf16.msra.mxu0 0
        %674 = vmatprep.subr.bf16.mxu0 0
        %675 = vmatpush2.bf16.msra.mxu0 0
        %676 = vmatprep.subr.bf16.mxu0 0
        %677 = vmatpush2.bf16.msra.mxu0 0
        %678 = vmatprep.mubr.bf16.mxu0 0
        %679 = vmatmul.mubr.bf16.gmra.mxu0 %v632
        %v680 = vpop.f32.mrf.mxu0
        %v681 = vadd.f32 0.0, %v680
        %v682 = vpop.f32.mrf.mxu0
        %v683 = vpop.f32.mrf.mxu0
        %v684 = vadd.f32 0.0, %v683
        %v685 = vpop.f32.mrf.mxu0
        %686 = vmatprep.mubr.bf16.mxu0 0
        %687 = vmatmul.mubr.bf16.gmra.mxu0 %v635
        %v688 = vpop.f32.mrf.mxu0
        %v689 = vadd.f32 0.0, %v688
        %v690 = vpop.f32.mrf.mxu0
        %v691 = vpop.f32.mrf.mxu0
        %v692 = vadd.f32 0.0, %v691
        %v693 = vpop.f32.mrf.mxu0
        %694 = vmatprep.mubr.bf16.mxu0 0
        %695 = vmatmul.mubr.bf16.gmra.mxu0 %v638
        %v696 = vpop.f32.mrf.mxu0
        %v697 = vadd.f32 0.0, %v696
        %v698 = vpop.f32.mrf.mxu0
        %v699 = vpop.f32.mrf.mxu0
        %v700 = vadd.f32 0.0, %v699
        %v701 = vpop.f32.mrf.mxu0
        %702 = vmatprep.mubr.bf16.mxu0 0
        %703 = vmatmul.mubr.bf16.gmra.mxu0 %v641
        %v704 = vpop.f32.mrf.mxu0
        %v705 = vadd.f32 0.0, %v704
        %v706 = vpop.f32.mrf.mxu0
        %v707 = vpop.f32.mrf.mxu0
        %v708 = vadd.f32 0.0, %v707
        %v709 = vpop.f32.mrf.mxu0
        %710 = vdwg.mxu0
        %v711 = vadd.f32 %v494, %v681
        %v712 = vadd.f32 %v495, %v684
        %v713 = vadd.f32 %v496, %v689
        %v714 = vadd.f32 %v497, %v692
        %v715 = vadd.f32 %v498, %v697
        %v716 = vadd.f32 %v499, %v700
        %v717 = vadd.f32 %v500, %v705
        %v718 = vadd.f32 %v501, %v708
        %s719 = scalar_lea.vmem %s215, 6
        %v720 = vld [vmem:[%s719] sm:$0x3]
        %v729 = vunpack.c.l.b16 %v249
        %v730 = vunpack.c.l.b16 %v251
        %v731 = vunpack.c.l.b16 %v253
        %v732 = vunpack.c.l.b16 %v255
        %v733 = vunpack.c.l.b16 %v257
        %v734 = vunpack.c.l.b16 %v259
        %v735 = vunpack.c.l.b16 %v261
        %v736 = vunpack.c.l.b16 %v263
        %v737 = vpack.c.b16 %v730, %v729
        %v738 = vpack.c.b16 %v732, %v731
        %v739 = vpack.c.b16 %v734, %v733
        %v740 = vpack.c.b16 %v736, %v735
        %v742 = vsel %vm296, %v737, 0
        %v745 = vsel %vm296, %v738, 0
        %v748 = vsel %vm296, %v739, 0
        %v751 = vsel %vm296, %v740, 0
        %v754 = vsel %vm309, %v720, 0
        %756 = vmatprep.subr.bf16.mxu0 0
        %757 = vmatpush1.bf16.msra.mxu0 0
        %758 = vmatprep.subr.bf16.mxu0 0
        %759 = vmatpush1.bf16.msra.mxu0 0
        %760 = vmatprep.subr.bf16.mxu0 0
        %761 = vmatpush1.bf16.msra.mxu0 0
        %762 = vmatprep.subr.bf16.mxu0 0
        %763 = vmatpush1.bf16.msra.mxu0 0
        %764 = vmatprep.subr.bf16.mxu0 0
        %765 = vmatpush1.bf16.msra.mxu0 0
        %766 = vmatprep.subr.bf16.mxu0 0
        %767 = vmatpush1.bf16.msra.mxu0 0
        %768 = vmatprep.subr.bf16.mxu0 0
        %769 = vmatpush1.bf16.msra.mxu0 0
        %770 = vmatprep.subr.bf16.mxu0 0
        %771 = vmatpush1.bf16.msra.mxu0 %v754
        %772 = vmatprep.subr.bf16.mxu0 0
        %773 = vmatpush2.bf16.msra.mxu0 0
        %774 = vmatprep.subr.bf16.mxu0 0
        %775 = vmatpush2.bf16.msra.mxu0 0
        %776 = vmatprep.subr.bf16.mxu0 0
        %777 = vmatpush2.bf16.msra.mxu0 0
        %778 = vmatprep.subr.bf16.mxu0 0
        %779 = vmatpush2.bf16.msra.mxu0 0
        %780 = vmatprep.subr.bf16.mxu0 0
        %781 = vmatpush2.bf16.msra.mxu0 0
        %782 = vmatprep.subr.bf16.mxu0 0
        %783 = vmatpush2.bf16.msra.mxu0 0
        %784 = vmatprep.subr.bf16.mxu0 0
        %785 = vmatpush2.bf16.msra.mxu0 0
        %786 = vmatprep.subr.bf16.mxu0 0
        %787 = vmatpush2.bf16.msra.mxu0 0
        %788 = vmatprep.mubr.bf16.mxu0 0
        %789 = vmatmul.mubr.bf16.gmra.mxu0 %v742
        %v790 = vpop.f32.mrf.mxu0
        %v791 = vadd.f32 0.0, %v790
        %v792 = vpop.f32.mrf.mxu0
        %v793 = vpop.f32.mrf.mxu0
        %v794 = vadd.f32 0.0, %v793
        %v795 = vpop.f32.mrf.mxu0
        %796 = vmatprep.mubr.bf16.mxu0 0
        %797 = vmatmul.mubr.bf16.gmra.mxu0 %v745
        %v798 = vpop.f32.mrf.mxu0
        %v799 = vadd.f32 0.0, %v798
        %v800 = vpop.f32.mrf.mxu0
        %v801 = vpop.f32.mrf.mxu0
        %v802 = vadd.f32 0.0, %v801
        %v803 = vpop.f32.mrf.mxu0
        %804 = vmatprep.mubr.bf16.mxu0 0
        %805 = vmatmul.mubr.bf16.gmra.mxu0 %v748
        %v806 = vpop.f32.mrf.mxu0
        %v807 = vadd.f32 0.0, %v806
        %v808 = vpop.f32.mrf.mxu0
        %v809 = vpop.f32.mrf.mxu0
        %v810 = vadd.f32 0.0, %v809
        %v811 = vpop.f32.mrf.mxu0
        %812 = vmatprep.mubr.bf16.mxu0 0
        %813 = vmatmul.mubr.bf16.gmra.mxu0 %v751
        %v814 = vpop.f32.mrf.mxu0
        %v815 = vadd.f32 0.0, %v814
        %v816 = vpop.f32.mrf.mxu0
        %v817 = vpop.f32.mrf.mxu0
        %v818 = vadd.f32 0.0, %v817
        %v819 = vpop.f32.mrf.mxu0
        %820 = vdwg.mxu0
        %v821 = vadd.f32 %v711, %v791
        %v822 = vadd.f32 %v712, %v794
        %v823 = vadd.f32 %v713, %v799
        %v824 = vadd.f32 %v714, %v802
        %v825 = vadd.f32 %v715, %v807
        %v826 = vadd.f32 %v716, %v810
        %v827 = vadd.f32 %v717, %v815
        %v828 = vadd.f32 %v718, %v818
        %s829 = scalar_lea.vmem %s215, 8
        %v830 = vld [vmem:[%s829] sm:$0x3]
        %v839 = vunpack.c.l.b16 %v266
        %v840 = vunpack.c.l.b16 %v267
        %v841 = vunpack.c.l.b16 %v268
        %v842 = vunpack.c.l.b16 %v269
        %v843 = vunpack.c.l.b16 %v270
        %v844 = vunpack.c.l.b16 %v271
        %v845 = vunpack.c.l.b16 %v272
        %v846 = vunpack.c.l.b16 %v273
        %v847 = vpack.c.b16 %v840, %v839
        %v848 = vpack.c.b16 %v842, %v841
        %v849 = vpack.c.b16 %v844, %v843
        %v850 = vpack.c.b16 %v846, %v845
        %v852 = vsel %vm296, %v847, 0
        %v855 = vsel %vm296, %v848, 0
        %v858 = vsel %vm296, %v849, 0
        %v861 = vsel %vm296, %v850, 0
        %v864 = vsel %vm309, %v830, 0
        %866 = vmatprep.subr.bf16.mxu0 0
        %867 = vmatpush1.bf16.msra.mxu0 0
        %868 = vmatprep.subr.bf16.mxu0 0
        %869 = vmatpush1.bf16.msra.mxu0 0
        %870 = vmatprep.subr.bf16.mxu0 0
        %871 = vmatpush1.bf16.msra.mxu0 0
        %872 = vmatprep.subr.bf16.mxu0 0
        %873 = vmatpush1.bf16.msra.mxu0 0
        %874 = vmatprep.subr.bf16.mxu0 0
        %875 = vmatpush1.bf16.msra.mxu0 0
        %876 = vmatprep.subr.bf16.mxu0 0
        %877 = vmatpush1.bf16.msra.mxu0 0
        %878 = vmatprep.subr.bf16.mxu0 0
        %879 = vmatpush1.bf16.msra.mxu0 0
        %880 = vmatprep.subr.bf16.mxu0 0
        %881 = vmatpush1.bf16.msra.mxu0 %v864
        %882 = vmatprep.subr.bf16.mxu0 0
        %883 = vmatpush2.bf16.msra.mxu0 0
        %884 = vmatprep.subr.bf16.mxu0 0
        %885 = vmatpush2.bf16.msra.mxu0 0
        %886 = vmatprep.subr.bf16.mxu0 0
        %887 = vmatpush2.bf16.msra.mxu0 0
        %888 = vmatprep.subr.bf16.mxu0 0
        %889 = vmatpush2.bf16.msra.mxu0 0
        %890 = vmatprep.subr.bf16.mxu0 0
        %891 = vmatpush2.bf16.msra.mxu0 0
        %892 = vmatprep.subr.bf16.mxu0 0
        %893 = vmatpush2.bf16.msra.mxu0 0
        %894 = vmatprep.subr.bf16.mxu0 0
        %895 = vmatpush2.bf16.msra.mxu0 0
        %896 = vmatprep.subr.bf16.mxu0 0
        %897 = vmatpush2.bf16.msra.mxu0 0
        %898 = vmatprep.mubr.bf16.mxu0 0
        %899 = vmatmul.mubr.bf16.gmra.mxu0 %v852
        %v900 = vpop.f32.mrf.mxu0
        %v901 = vadd.f32 0.0, %v900
        %v902 = vpop.f32.mrf.mxu0
        %v903 = vpop.f32.mrf.mxu0
        %v904 = vadd.f32 0.0, %v903
        %v905 = vpop.f32.mrf.mxu0
        %906 = vmatprep.mubr.bf16.mxu0 0
        %907 = vmatmul.mubr.bf16.gmra.mxu0 %v855
        %v908 = vpop.f32.mrf.mxu0
        %v909 = vadd.f32 0.0, %v908
        %v910 = vpop.f32.mrf.mxu0
        %v911 = vpop.f32.mrf.mxu0
        %v912 = vadd.f32 0.0, %v911
        %v913 = vpop.f32.mrf.mxu0
        %914 = vmatprep.mubr.bf16.mxu0 0
        %915 = vmatmul.mubr.bf16.gmra.mxu0 %v858
        %v916 = vpop.f32.mrf.mxu0
        %v917 = vadd.f32 0.0, %v916
        %v918 = vpop.f32.mrf.mxu0
        %v919 = vpop.f32.mrf.mxu0
        %v920 = vadd.f32 0.0, %v919
        %v921 = vpop.f32.mrf.mxu0
        %922 = vmatprep.mubr.bf16.mxu0 0
        %923 = vmatmul.mubr.bf16.gmra.mxu0 %v861
        %v924 = vpop.f32.mrf.mxu0
        %v925 = vadd.f32 0.0, %v924
        %v926 = vpop.f32.mrf.mxu0
        %v927 = vpop.f32.mrf.mxu0
        %v928 = vadd.f32 0.0, %v927
        %v929 = vpop.f32.mrf.mxu0
        %930 = vdwg.mxu0
        %v931 = vadd.f32 %v821, %v901
        %v932 = vadd.f32 %v822, %v904
        %v933 = vadd.f32 %v823, %v909
        %v934 = vadd.f32 %v824, %v912
        %v935 = vadd.f32 %v825, %v917
        %v936 = vadd.f32 %v826, %v920
        %v937 = vadd.f32 %v827, %v925
        %v938 = vadd.f32 %v828, %v928
        %v940 = vshrl.u32 %v249, 16
        %v942 = vrot.slane %v940, 4
        %v943 = vshll.u32 %v249, 16
        %v945 = vrot.slane %v943, 5
        %v946 = vor.u32 %v942, %v945
        %v947 = vrot.slane %v946, 4
        %v949 = vshll.u32 %v250, 16
        %v951 = vrot.slane %v949, 5
        %v952 = vsel %vm504, %v947, %v951
        %v954 = vshrl.u32 %v251, 16
        %v956 = vrot.slane %v954, 4
        %v957 = vshll.u32 %v251, 16
        %v959 = vrot.slane %v957, 5
        %v960 = vor.u32 %v956, %v959
        %v961 = vrot.slane %v960, 4
        %v963 = vshll.u32 %v252, 16
        %v965 = vrot.slane %v963, 5
        %v966 = vsel %vm504, %v961, %v965
        %v968 = vshrl.u32 %v253, 16
        %v970 = vrot.slane %v968, 4
        %v971 = vshll.u32 %v253, 16
        %v973 = vrot.slane %v971, 5
        %v974 = vor.u32 %v970, %v973
        %v975 = vrot.slane %v974, 4
        %v977 = vshll.u32 %v254, 16
        %v979 = vrot.slane %v977, 5
        %v980 = vsel %vm504, %v975, %v979
        %v982 = vshrl.u32 %v255, 16
        %v984 = vrot.slane %v982, 4
        %v985 = vshll.u32 %v255, 16
        %v987 = vrot.slane %v985, 5
        %v988 = vor.u32 %v984, %v987
        %v989 = vrot.slane %v988, 4
        %v991 = vshll.u32 %v256, 16
        %v993 = vrot.slane %v991, 5
        %v994 = vsel %vm504, %v989, %v993
        %v996 = vshrl.u32 %v257, 16
        %v998 = vrot.slane %v996, 4
        %v999 = vshll.u32 %v257, 16
        %v1001 = vrot.slane %v999, 5
        %v1002 = vor.u32 %v998, %v1001
        %v1003 = vrot.slane %v1002, 4
        %v1005 = vshll.u32 %v258, 16
        %v1007 = vrot.slane %v1005, 5
        %v1008 = vsel %vm504, %v1003, %v1007
        %v1010 = vshrl.u32 %v259, 16
        %v1012 = vrot.slane %v1010, 4
        %v1013 = vshll.u32 %v259, 16
        %v1015 = vrot.slane %v1013, 5
        %v1016 = vor.u32 %v1012, %v1015
        %v1017 = vrot.slane %v1016, 4
        %v1019 = vshll.u32 %v260, 16
        %v1021 = vrot.slane %v1019, 5
        %v1022 = vsel %vm504, %v1017, %v1021
        %v1024 = vshrl.u32 %v261, 16
        %v1026 = vrot.slane %v1024, 4
        %v1027 = vshll.u32 %v261, 16
        %v1029 = vrot.slane %v1027, 5
        %v1030 = vor.u32 %v1026, %v1029
        %v1031 = vrot.slane %v1030, 4
        %v1033 = vshll.u32 %v262, 16
        %v1035 = vrot.slane %v1033, 5
        %v1036 = vsel %vm504, %v1031, %v1035
        %v1038 = vshrl.u32 %v263, 16
        %v1040 = vrot.slane %v1038, 4
        %v1041 = vshll.u32 %v263, 16
        %v1043 = vrot.slane %v1041, 5
        %v1044 = vor.u32 %v1040, %v1043
        %v1045 = vrot.slane %v1044, 4
        %v1047 = vshll.u32 %v264, 16
        %v1049 = vrot.slane %v1047, 5
        %v1050 = vsel %vm504, %v1045, %v1049
        %s1051 = scalar_lea.vmem %s215, 10
        %v1052 = vld [vmem:[%s1051] sm:$0x3]
        %v1053 = vunpack.c.l.b16 %v952
        %v1054 = vunpack.c.l.b16 %v966
        %v1055 = vunpack.c.l.b16 %v980
        %v1056 = vunpack.c.l.b16 %v994
        %v1057 = vunpack.c.l.b16 %v1008
        %v1058 = vunpack.c.l.b16 %v1022
        %v1059 = vunpack.c.l.b16 %v1036
        %v1060 = vunpack.c.l.b16 %v1050
        %v1061 = vpack.c.b16 %v1054, %v1053
        %v1062 = vpack.c.b16 %v1056, %v1055
        %v1063 = vpack.c.b16 %v1058, %v1057
        %v1064 = vpack.c.b16 %v1060, %v1059
        %v1066 = vsel %vm296, %v1061, 0
        %v1069 = vsel %vm296, %v1062, 0
        %v1072 = vsel %vm296, %v1063, 0
        %v1075 = vsel %vm296, %v1064, 0
        %v1078 = vsel %vm309, %v1052, 0
        %1080 = vmatprep.subr.bf16.mxu0 0
        %1081 = vmatpush1.bf16.msra.mxu0 0
        %1082 = vmatprep.subr.bf16.mxu0 0
        %1083 = vmatpush1.bf16.msra.mxu0 0
        %1084 = vmatprep.subr.bf16.mxu0 0
        %1085 = vmatpush1.bf16.msra.mxu0 0
        %1086 = vmatprep.subr.bf16.mxu0 0
        %1087 = vmatpush1.bf16.msra.mxu0 0
        %1088 = vmatprep.subr.bf16.mxu0 0
        %1089 = vmatpush1.bf16.msra.mxu0 0
        %1090 = vmatprep.subr.bf16.mxu0 0
        %1091 = vmatpush1.bf16.msra.mxu0 0
        %1092 = vmatprep.subr.bf16.mxu0 0
        %1093 = vmatpush1.bf16.msra.mxu0 0
        %1094 = vmatprep.subr.bf16.mxu0 0
        %1095 = vmatpush1.bf16.msra.mxu0 %v1078
        %1096 = vmatprep.subr.bf16.mxu0 0
        %1097 = vmatpush2.bf16.msra.mxu0 0
        %1098 = vmatprep.subr.bf16.mxu0 0
        %1099 = vmatpush2.bf16.msra.mxu0 0
        %1100 = vmatprep.subr.bf16.mxu0 0
        %1101 = vmatpush2.bf16.msra.mxu0 0
        %1102 = vmatprep.subr.bf16.mxu0 0
        %1103 = vmatpush2.bf16.msra.mxu0 0
        %1104 = vmatprep.subr.bf16.mxu0 0
        %1105 = vmatpush2.bf16.msra.mxu0 0
        %1106 = vmatprep.subr.bf16.mxu0 0
        %1107 = vmatpush2.bf16.msra.mxu0 0
        %1108 = vmatprep.subr.bf16.mxu0 0
        %1109 = vmatpush2.bf16.msra.mxu0 0
        %1110 = vmatprep.subr.bf16.mxu0 0
        %1111 = vmatpush2.bf16.msra.mxu0 0
        %1112 = vmatprep.mubr.bf16.mxu0 0
        %1113 = vmatmul.mubr.bf16.gmra.mxu0 %v1066
        %v1114 = vpop.f32.mrf.mxu0
        %v1115 = vadd.f32 0.0, %v1114
        %v1116 = vpop.f32.mrf.mxu0
        %v1117 = vpop.f32.mrf.mxu0
        %v1118 = vadd.f32 0.0, %v1117
        %v1119 = vpop.f32.mrf.mxu0
        %1120 = vmatprep.mubr.bf16.mxu0 0
        %1121 = vmatmul.mubr.bf16.gmra.mxu0 %v1069
        %v1122 = vpop.f32.mrf.mxu0
        %v1123 = vadd.f32 0.0, %v1122
        %v1124 = vpop.f32.mrf.mxu0
        %v1125 = vpop.f32.mrf.mxu0
        %v1126 = vadd.f32 0.0, %v1125
        %v1127 = vpop.f32.mrf.mxu0
        %1128 = vmatprep.mubr.bf16.mxu0 0
        %1129 = vmatmul.mubr.bf16.gmra.mxu0 %v1072
        %v1130 = vpop.f32.mrf.mxu0
        %v1131 = vadd.f32 0.0, %v1130
        %v1132 = vpop.f32.mrf.mxu0
        %v1133 = vpop.f32.mrf.mxu0
        %v1134 = vadd.f32 0.0, %v1133
        %v1135 = vpop.f32.mrf.mxu0
        %1136 = vmatprep.mubr.bf16.mxu0 0
        %1137 = vmatmul.mubr.bf16.gmra.mxu0 %v1075
        %v1138 = vpop.f32.mrf.mxu0
        %v1139 = vadd.f32 0.0, %v1138
        %v1140 = vpop.f32.mrf.mxu0
        %v1141 = vpop.f32.mrf.mxu0
        %v1142 = vadd.f32 0.0, %v1141
        %v1143 = vpop.f32.mrf.mxu0
        %1144 = vdwg.mxu0
        %v1145 = vadd.f32 %v931, %v1115
        %v1146 = vadd.f32 %v932, %v1118
        %v1147 = vadd.f32 %v933, %v1123
        %v1148 = vadd.f32 %v934, %v1126
        %v1149 = vadd.f32 %v935, %v1131
        %v1150 = vadd.f32 %v936, %v1134
        %v1151 = vadd.f32 %v937, %v1139
        %v1152 = vadd.f32 %v938, %v1142
        %s1153 = scalar_lea.vmem %s215, 12
        %v1154 = vld [vmem:[%s1153] sm:$0x3]
        %v1156 = vunpack.c.l.b16 %v236
        %v1157 = vpack.c.b16 %v286, %v285
        %v1158 = vpack.c.b16 %v288, %v287
        %v1159 = vpack.c.b16 %v290, %v289
        %v1160 = vpack.c.b16 %v1156, %v291
        %v1162 = vsel %vm296, %v1157, 0
        %v1165 = vsel %vm296, %v1158, 0
        %v1168 = vsel %vm296, %v1159, 0
        %v1171 = vsel %vm296, %v1160, 0
        %v1174 = vsel %vm309, %v1154, 0
        %1176 = vmatprep.subr.bf16.mxu0 0
        %1177 = vmatpush1.bf16.msra.mxu0 0
        %1178 = vmatprep.subr.bf16.mxu0 0
        %1179 = vmatpush1.bf16.msra.mxu0 0
        %1180 = vmatprep.subr.bf16.mxu0 0
        %1181 = vmatpush1.bf16.msra.mxu0 0
        %1182 = vmatprep.subr.bf16.mxu0 0
        %1183 = vmatpush1.bf16.msra.mxu0 0
        %1184 = vmatprep.subr.bf16.mxu0 0
        %1185 = vmatpush1.bf16.msra.mxu0 0
        %1186 = vmatprep.subr.bf16.mxu0 0
        %1187 = vmatpush1.bf16.msra.mxu0 0
        %1188 = vmatprep.subr.bf16.mxu0 0
        %1189 = vmatpush1.bf16.msra.mxu0 0
        %1190 = vmatprep.subr.bf16.mxu0 0
        %1191 = vmatpush1.bf16.msra.mxu0 %v1174
        %1192 = vmatprep.subr.bf16.mxu0 0
        %1193 = vmatpush2.bf16.msra.mxu0 0
        %1194 = vmatprep.subr.bf16.mxu0 0
        %1195 = vmatpush2.bf16.msra.mxu0 0
        %1196 = vmatprep.subr.bf16.mxu0 0
        %1197 = vmatpush2.bf16.msra.mxu0 0
        %1198 = vmatprep.subr.bf16.mxu0 0
        %1199 = vmatpush2.bf16.msra.mxu0 0
        %1200 = vmatprep.subr.bf16.mxu0 0
        %1201 = vmatpush2.bf16.msra.mxu0 0
        %1202 = vmatprep.subr.bf16.mxu0 0
        %1203 = vmatpush2.bf16.msra.mxu0 0
        %1204 = vmatprep.subr.bf16.mxu0 0
        %1205 = vmatpush2.bf16.msra.mxu0 0
        %1206 = vmatprep.subr.bf16.mxu0 0
        %1207 = vmatpush2.bf16.msra.mxu0 0
        %1208 = vmatprep.mubr.bf16.mxu0 0
        %1209 = vmatmul.mubr.bf16.gmra.mxu0 %v1162
        %v1210 = vpop.f32.mrf.mxu0
        %v1211 = vadd.f32 0.0, %v1210
        %v1212 = vpop.f32.mrf.mxu0
        %v1213 = vpop.f32.mrf.mxu0
        %v1214 = vadd.f32 0.0, %v1213
        %v1215 = vpop.f32.mrf.mxu0
        %1216 = vmatprep.mubr.bf16.mxu0 0
        %1217 = vmatmul.mubr.bf16.gmra.mxu0 %v1165
        %v1218 = vpop.f32.mrf.mxu0
        %v1219 = vadd.f32 0.0, %v1218
        %v1220 = vpop.f32.mrf.mxu0
        %v1221 = vpop.f32.mrf.mxu0
        %v1222 = vadd.f32 0.0, %v1221
        %v1223 = vpop.f32.mrf.mxu0
        %1224 = vmatprep.mubr.bf16.mxu0 0
        %1225 = vmatmul.mubr.bf16.gmra.mxu0 %v1168
        %v1226 = vpop.f32.mrf.mxu0
        %v1227 = vadd.f32 0.0, %v1226
        %v1228 = vpop.f32.mrf.mxu0
        %v1229 = vpop.f32.mrf.mxu0
        %v1230 = vadd.f32 0.0, %v1229
        %v1231 = vpop.f32.mrf.mxu0
        %1232 = vmatprep.mubr.bf16.mxu0 0
        %1233 = vmatmul.mubr.bf16.gmra.mxu0 %v1171
        %v1234 = vpop.f32.mrf.mxu0
        %v1235 = vadd.f32 0.0, %v1234
        %v1236 = vpop.f32.mrf.mxu0
        %v1237 = vpop.f32.mrf.mxu0
        %v1238 = vadd.f32 0.0, %v1237
        %v1239 = vpop.f32.mrf.mxu0
        %1240 = vdwg.mxu0
        %v1241 = vadd.f32 %v1145, %v1211
        %v1242 = vadd.f32 %v1146, %v1214
        %v1243 = vadd.f32 %v1147, %v1219
        %v1244 = vadd.f32 %v1148, %v1222
        %v1245 = vadd.f32 %v1149, %v1227
        %v1246 = vadd.f32 %v1150, %v1230
        %v1247 = vadd.f32 %v1151, %v1235
        %v1248 = vadd.f32 %v1152, %v1238
        %s1249 = scalar_lea.vmem %s215, 14
        %v1250 = vld [vmem:[%s1249] sm:$0x3]
        %v1252 = vunpack.c.l.b16 %v247
        %v1253 = vpack.c.b16 %v404, %v403
        %v1254 = vpack.c.b16 %v406, %v405
        %v1255 = vpack.c.b16 %v408, %v407
        %v1256 = vpack.c.b16 %v1252, %v409
        %v1258 = vsel %vm296, %v1253, 0
        %v1261 = vsel %vm296, %v1254, 0
        %v1264 = vsel %vm296, %v1255, 0
        %v1267 = vsel %vm296, %v1256, 0
        %v1270 = vsel %vm309, %v1250, 0
        %1272 = vmatprep.subr.bf16.mxu0 0
        %1273 = vmatpush1.bf16.msra.mxu0 0
        %1274 = vmatprep.subr.bf16.mxu0 0
        %1275 = vmatpush1.bf16.msra.mxu0 0
        %1276 = vmatprep.subr.bf16.mxu0 0
        %1277 = vmatpush1.bf16.msra.mxu0 0
        %1278 = vmatprep.subr.bf16.mxu0 0
        %1279 = vmatpush1.bf16.msra.mxu0 0
        %1280 = vmatprep.subr.bf16.mxu0 0
        %1281 = vmatpush1.bf16.msra.mxu0 0
        %1282 = vmatprep.subr.bf16.mxu0 0
        %1283 = vmatpush1.bf16.msra.mxu0 0
        %1284 = vmatprep.subr.bf16.mxu0 0
        %1285 = vmatpush1.bf16.msra.mxu0 0
        %1286 = vmatprep.subr.bf16.mxu0 0
        %1287 = vmatpush1.bf16.msra.mxu0 %v1270
        %1288 = vmatprep.subr.bf16.mxu0 0
        %1289 = vmatpush2.bf16.msra.mxu0 0
        %1290 = vmatprep.subr.bf16.mxu0 0
        %1291 = vmatpush2.bf16.msra.mxu0 0
        %1292 = vmatprep.subr.bf16.mxu0 0
        %1293 = vmatpush2.bf16.msra.mxu0 0
        %1294 = vmatprep.subr.bf16.mxu0 0
        %1295 = vmatpush2.bf16.msra.mxu0 0
        %1296 = vmatprep.subr.bf16.mxu0 0
        %1297 = vmatpush2.bf16.msra.mxu0 0
        %1298 = vmatprep.subr.bf16.mxu0 0
        %1299 = vmatpush2.bf16.msra.mxu0 0
        %1300 = vmatprep.subr.bf16.mxu0 0
        %1301 = vmatpush2.bf16.msra.mxu0 0
        %1302 = vmatprep.subr.bf16.mxu0 0
        %1303 = vmatpush2.bf16.msra.mxu0 0
        %1304 = vmatprep.mubr.bf16.mxu0 0
        %1305 = vmatmul.mubr.bf16.gmra.mxu0 %v1258
        %v1306 = vpop.f32.mrf.mxu0
        %v1307 = vadd.f32 0.0, %v1306
        %v1308 = vpop.f32.mrf.mxu0
        %v1309 = vpop.f32.mrf.mxu0
        %v1310 = vadd.f32 0.0, %v1309
        %v1311 = vpop.f32.mrf.mxu0
        %1312 = vmatprep.mubr.bf16.mxu0 0
        %1313 = vmatmul.mubr.bf16.gmra.mxu0 %v1261
        %v1314 = vpop.f32.mrf.mxu0
        %v1315 = vadd.f32 0.0, %v1314
        %v1316 = vpop.f32.mrf.mxu0
        %v1317 = vpop.f32.mrf.mxu0
        %v1318 = vadd.f32 0.0, %v1317
        %v1319 = vpop.f32.mrf.mxu0
        %1320 = vmatprep.mubr.bf16.mxu0 0
        %1321 = vmatmul.mubr.bf16.gmra.mxu0 %v1264
        %v1322 = vpop.f32.mrf.mxu0
        %v1323 = vadd.f32 0.0, %v1322
        %v1324 = vpop.f32.mrf.mxu0
        %v1325 = vpop.f32.mrf.mxu0
        %v1326 = vadd.f32 0.0, %v1325
        %v1327 = vpop.f32.mrf.mxu0
        %1328 = vmatprep.mubr.bf16.mxu0 0
        %1329 = vmatmul.mubr.bf16.gmra.mxu0 %v1267
        %v1330 = vpop.f32.mrf.mxu0
        %v1331 = vadd.f32 0.0, %v1330
        %v1332 = vpop.f32.mrf.mxu0
        %v1333 = vpop.f32.mrf.mxu0
        %v1334 = vadd.f32 0.0, %v1333
        %v1335 = vpop.f32.mrf.mxu0
        %1336 = vdwg.mxu0
        %v1337 = vadd.f32 %v1241, %v1307
        %v1338 = vadd.f32 %v1242, %v1310
        %v1339 = vadd.f32 %v1243, %v1315
        %v1340 = vadd.f32 %v1244, %v1318
        %v1341 = vadd.f32 %v1245, %v1323
        %v1342 = vadd.f32 %v1246, %v1326
        %v1343 = vadd.f32 %v1247, %v1331
        %v1344 = vadd.f32 %v1248, %v1334
        %v1346 = vshrl.u32 %v236, 16
        %v1348 = vrot.slane %v1346, 4
        %v1349 = vshll.u32 %v236, 16
        %v1351 = vrot.slane %v1349, 5
        %v1352 = vor.u32 %v1348, %v1351
        %v1353 = vrot.slane %v1352, 4
        %v1355 = vshll.u32 %v237, 16
        %v1357 = vrot.slane %v1355, 5
        %v1358 = vsel %vm504, %v1353, %v1357
        %s1359 = scalar_lea.vmem %s215, 16
        %v1360 = vld [vmem:[%s1359] sm:$0x3]
        %v1361 = vunpack.c.l.b16 %v1358
        %v1362 = vpack.c.b16 %v621, %v620
        %v1363 = vpack.c.b16 %v623, %v622
        %v1364 = vpack.c.b16 %v625, %v624
        %v1365 = vpack.c.b16 %v1361, %v626
        %v1367 = vsel %vm296, %v1362, 0
        %v1370 = vsel %vm296, %v1363, 0
        %v1373 = vsel %vm296, %v1364, 0
        %v1376 = vsel %vm296, %v1365, 0
        %v1379 = vsel %vm309, %v1360, 0
        %1381 = vmatprep.subr.bf16.mxu0 0
        %1382 = vmatpush1.bf16.msra.mxu0 0
        %1383 = vmatprep.subr.bf16.mxu0 0
        %1384 = vmatpush1.bf16.msra.mxu0 0
        %1385 = vmatprep.subr.bf16.mxu0 0
        %1386 = vmatpush1.bf16.msra.mxu0 0
        %1387 = vmatprep.subr.bf16.mxu0 0
        %1388 = vmatpush1.bf16.msra.mxu0 0
        %1389 = vmatprep.subr.bf16.mxu0 0
        %1390 = vmatpush1.bf16.msra.mxu0 0
        %1391 = vmatprep.subr.bf16.mxu0 0
        %1392 = vmatpush1.bf16.msra.mxu0 0
        %1393 = vmatprep.subr.bf16.mxu0 0
        %1394 = vmatpush1.bf16.msra.mxu0 0
        %1395 = vmatprep.subr.bf16.mxu0 0
        %1396 = vmatpush1.bf16.msra.mxu0 %v1379
        %1397 = vmatprep.subr.bf16.mxu0 0
        %1398 = vmatpush2.bf16.msra.mxu0 0
        %1399 = vmatprep.subr.bf16.mxu0 0
        %1400 = vmatpush2.bf16.msra.mxu0 0
        %1401 = vmatprep.subr.bf16.mxu0 0
        %1402 = vmatpush2.bf16.msra.mxu0 0
        %1403 = vmatprep.subr.bf16.mxu0 0
        %1404 = vmatpush2.bf16.msra.mxu0 0
        %1405 = vmatprep.subr.bf16.mxu0 0
        %1406 = vmatpush2.bf16.msra.mxu0 0
        %1407 = vmatprep.subr.bf16.mxu0 0
        %1408 = vmatpush2.bf16.msra.mxu0 0
        %1409 = vmatprep.subr.bf16.mxu0 0
        %1410 = vmatpush2.bf16.msra.mxu0 0
        %1411 = vmatprep.subr.bf16.mxu0 0
        %1412 = vmatpush2.bf16.msra.mxu0 0
        %1413 = vmatprep.mubr.bf16.mxu0 0
        %1414 = vmatmul.mubr.bf16.gmra.mxu0 %v1367
        %v1415 = vpop.f32.mrf.mxu0
        %v1416 = vadd.f32 0.0, %v1415
        %v1417 = vpop.f32.mrf.mxu0
        %v1418 = vpop.f32.mrf.mxu0
        %v1419 = vadd.f32 0.0, %v1418
        %v1420 = vpop.f32.mrf.mxu0
        %1421 = vmatprep.mubr.bf16.mxu0 0
        %1422 = vmatmul.mubr.bf16.gmra.mxu0 %v1370
        %v1423 = vpop.f32.mrf.mxu0
        %v1424 = vadd.f32 0.0, %v1423
        %v1425 = vpop.f32.mrf.mxu0
        %v1426 = vpop.f32.mrf.mxu0
        %v1427 = vadd.f32 0.0, %v1426
        %v1428 = vpop.f32.mrf.mxu0
        %1429 = vmatprep.mubr.bf16.mxu0 0
        %1430 = vmatmul.mubr.bf16.gmra.mxu0 %v1373
        %v1431 = vpop.f32.mrf.mxu0
        %v1432 = vadd.f32 0.0, %v1431
        %v1433 = vpop.f32.mrf.mxu0
        %v1434 = vpop.f32.mrf.mxu0
        %v1435 = vadd.f32 0.0, %v1434
        %v1436 = vpop.f32.mrf.mxu0
        %1437 = vmatprep.mubr.bf16.mxu0 0
        %1438 = vmatmul.mubr.bf16.gmra.mxu0 %v1376
        %v1439 = vpop.f32.mrf.mxu0
        %v1440 = vadd.f32 0.0, %v1439
        %v1441 = vpop.f32.mrf.mxu0
        %v1442 = vpop.f32.mrf.mxu0
        %v1443 = vadd.f32 0.0, %v1442
        %v1444 = vpop.f32.mrf.mxu0
        %1445 = vdwg.mxu0
        %v1446 = vadd.f32 %v1337, %v1416
        %v1447 = vadd.f32 %v1338, %v1419
        %v1448 = vadd.f32 %v1339, %v1424
        %v1449 = vadd.f32 %v1340, %v1427
        %v1450 = vadd.f32 %v1341, %v1432
        %v1451 = vadd.f32 %v1342, %v1435
        %v1452 = vadd.f32 %v1343, %v1440
        %v1453 = vadd.f32 %v1344, %v1443
        %v1454 = vmax.f32 %v1446, 0.0
        %v1455 = vmax.f32 %v1447, 0.0
        %v1456 = vmax.f32 %v1448, 0.0
        %v1457 = vmax.f32 %v1449, 0.0
        %v1458 = vmax.f32 %v1450, 0.0
        %v1459 = vmax.f32 %v1451, 0.0
        %v1460 = vmax.f32 %v1452, 0.0
        %v1461 = vmax.f32 %v1453, 0.0
        %v1462 = vpack.c.bf16 %v1454, %v1454
        %v1463 = vpack.c.bf16 %v1455, %v1455
        %v1464 = vpack.c.bf16 %v1456, %v1456
        %v1465 = vpack.c.bf16 %v1457, %v1457
        %v1466 = vpack.c.bf16 %v1458, %v1458
        %v1467 = vpack.c.bf16 %v1459, %v1459
        %v1468 = vpack.c.bf16 %v1460, %v1460
        %v1469 = vpack.c.bf16 %v1461, %v1461
        %vm1470 = vcmask 60416
        %1471 = vst.msk [vmem:[%s204] sm:$0xf] %vm1470, %v1462
        %1472 = vst.msk [vmem:[%s204 + $0x4] sm:$0xf] %vm1470, %v1463
        %1473 = vst.msk [vmem:[%s204 + $0x8] sm:$0xf] %vm1470, %v1464
        %1474 = vst.msk [vmem:[%s204 + $0xc] sm:$0xf] %vm1470, %v1465
        %1475 = vst.msk [vmem:[%s204 + $0x10] sm:$0xf] %vm1470, %v1466
        %1476 = vst.msk [vmem:[%s204 + $0x14] sm:$0xf] %vm1470, %v1467
        %1477 = vst.msk [vmem:[%s204 + $0x18] sm:$0xf] %vm1470, %v1468
        %1478 = vst.msk [vmem:[%s204 + $0x1c] sm:$0xf] %vm1470, %v1469
        %s1479 = sand.u32 %s117, 1
        %s1480 = scalar_lea.sflag [#allocation3], %s1479
        %s1481 = sand.u32 %s117, 1
        %s1482 = smul.addr %s1481, 32
        %s1483 = scalar_lea.vmem [#allocation2], %s1482
        // Predicated region
        $region33: #{tpu_custom_call.1} parent=31 // pred_check
          %p1484 = pneg %p127
        $region34: #{tpu_custom_call.1} parent=31 // pred_check_branch
          %1486 = sbr.rel (%p1484) target = $region36
        $region35: #{tpu_custom_call.1} parent=31 // pred_region
          %s1488 = ssub.s32 512, 512
          %1489 = vsyncadd %s1480, %s1488
          %s1490 = smul.addr %s21, 8
          %s1491 = sadd.s32 %s22, %s1490
          %s1492 = smul.addr %s1491, 64
          %s1493 = scalar_lea.hbm %s3, %s1492
          %s1494 = sshll.u32 %s1483, 4
          %s1495 = int_to_ptr.vmem [resolvable:$true] %s1494
          %1500 = dma.vmem_to_hbm [thread:$0]  %s1495, 512, %s1493, %s1480, 64, 64, 4
        $region36: #{tpu_custom_call.1} parent=31 // pred_fallthru
          _
      $region32: #{tpu_custom_call.1} parent=5 // pred_fallthru
        _
      %p1501 = scmp.le.s32.totalorder 2, %s12
      // Predicated region
      $region37: #{tpu_custom_call.1} parent=5 // pred_check
        %p1502 = pneg %p1501
      $region38: #{tpu_custom_call.1} parent=5 // pred_check_branch
        %1504 = sbr.rel (%p1502) target = $region40
      $region39: #{tpu_custom_call.1} parent=5 // pred_region
        %s1505 = ssub.s32 %s12, 2
        // Predicated region
        $region41: #{tpu_custom_call.1} parent=39 // pred_check
          %p1506 = pneg %p133
        $region42: #{tpu_custom_call.1} parent=39 // pred_check_branch
          %1508 = sbr.rel (%p1506) target = $region44
        $region43: #{tpu_custom_call.1} parent=39 // pred_region
          %s1509 = sand.u32 %s118, 1
          %s1510 = scalar_lea.sflag [#allocation3], %s1509
          %s1511 = sand.u32 %s118, 1
          %s1512 = smul.addr %s1511, 32
          %s1513 = scalar_lea.vmem [#allocation2], %s1512
          %1514 = dma.done %s1510, 512
        $region44: #{tpu_custom_call.1} parent=39 // pred_fallthru
          _
      $region40: #{tpu_custom_call.1} parent=5 // pred_fallthru
        _
    $region6: #{tpu_custom_call.1} parent=1 // loop_footer
      %s16 = sadd.s32 1, %s12
    $region7: #{tpu_custom_call.1} parent=1 // loop_footer_branch
      %11 = sbr.rel target = $region3
    $region8: #{tpu_custom_call.1} parent=1 // loop_exit
      _
    %1515 = vsyncpa [#allocation3], 1
    %s1516 = scalar_lea.sflag [#allocation3], 1
    %1517 = vsyncpa %s1516, 1

</llo_original>
